<compile_context>
chip_gen: v5e
topology: v5e:2x2
jax: 0.10.0
libtpu: 0.0.40
codegen_flags: <defaults>
</compile_context>

<pallas_src>
import functools

import jax
import jax.numpy as jnp
from jax.experimental import pallas as pl
from jax.experimental.pallas import tpu as pltpu

EPS = 1e-5  # nn.LayerNorm default


def _layernorm(x, gamma, beta):
    mean = jnp.mean(x, axis=-1, keepdims=True)
    var = jnp.mean((x - mean) ** 2, axis=-1, keepdims=True)  # biased, like PyTorch
    return (x - mean) * jax.lax.rsqrt(var + EPS) * gamma + beta


def encoder_layer_kernel(
    x_ref,
    wqkv_ref, bqkv_ref, wo3_ref, bo_ref,
    g1_ref, be1_ref,
    w1_ref, b1_ref, w2_ref, b2_ref,
    g2_ref, be2_ref,
    o_ref,
    *, num_heads, dense_store,
):
    BB, N, E = x_ref.shape
    R = BB * N                      # fused rows of this grid step (batch-contiguous)
    H = num_heads
    hd = E // H
    scale = hd ** (-0.5)
    mm = wqkv_ref.dtype             # MXU operand dtype (bf16 in production, f32 for checking)

    # Single load of x in its native dtype; one cast per consumer (no double cast).
    x_nat = x_ref[...].reshape(R, E)          # leading-dim merge only (no lane relayout)
    x_mm = x_nat.astype(mm)
    x_f32 = x_nat.astype(jnp.float32)         # residual / LayerNorm path

    # --- fused QKV projection: one (R, E) @ (E, 3E) matmul, one weight load ---
    qkv = jnp.dot(x_mm, wqkv_ref[...], preferred_element_type=jnp.float32) + bqkv_ref[...]
    q = qkv[:, :E] * scale                    # fold 1/sqrt(hd) into Q once
    k = qkv[:, E:2 * E]
    v = qkv[:, 2 * E:]

    # Head split -> (G, N, hd) with a leading (head, batch) axis.  Rows of the
    # slab are batch-contiguous, so every (h, b) slice attends only within its
    # own batch row: no block-diagonal mask, no masked score/exp/PV waste.
    def split_heads(t):
        parts = [t[:, h * hd:(h + 1) * hd].reshape(BB, N, hd) for h in range(H)]
        return parts[0] if H == 1 else jnp.concatenate(parts, axis=0)

    q_g = split_heads(q.astype(mm))
    k_g = split_heads(k.astype(mm))
    v_g = split_heads(v.astype(mm))

    # --- batched (head x batch) scaled dot-product attention ---
    s = jax.lax.dot_general(q_g, k_g, (((2,), (2,)), ((0,), (0,))),
                            preferred_element_type=jnp.float32)        # (G, N, N)
    s = s - jnp.max(s, axis=-1, keepdims=True)
    p = jnp.exp(s)
    denom = jnp.sum(p, axis=-1, keepdims=True)
    if mm == jnp.float32:
        p = p / denom                                   # exact softmax on the checking path
    else:
        p = p * pl.reciprocal(denom, approx=True)       # EUP slot, ~free
    ctx = jax.lax.dot_general(p.astype(mm), v_g, (((2,), (1,)), ((0,), (0,))),
                              preferred_element_type=jnp.float32)      # (G, N, hd)
    # TODO(synk): for large N (v7x 64 MiB VMEM), tile K/V along the source axis
    # with an online (flash-style) max/sum instead of materializing (G, N, N).

    # --- out-projection, Wo pre-split per head on the host to (H, hd, E) ---
    # One H-batched dot_general + adds == concat(heads) @ Wo, without an
    # in-kernel lane-axis concat/relayout of ctx.
    ctx = ctx.reshape(H, R, hd).astype(mm)              # leading-dim regroup only
    attn_h = jax.lax.dot_general(ctx, wo3_ref[...], (((2,), (1,)), ((0,), (0,))),
                                 preferred_element_type=jnp.float32)   # (H, R, E)
    attn = bo_ref[...].astype(jnp.float32) + attn_h[0]
    for h in range(1, H):
        attn = attn + attn_h[h]

    # --- residual + LayerNorm1, FFN (relu), residual + LayerNorm2 ---
    # TODO(synk): dropout / dropout1 / dropout2 are identity (inference semantics).
    y = _layernorm(x_f32 + attn, g1_ref[...], be1_ref[...])
    h1 = jnp.dot(y.astype(mm), w1_ref[...], preferred_element_type=jnp.float32) + b1_ref[...]
    h1 = jnp.maximum(h1, 0.0)
    ffn = jnp.dot(h1.astype(mm), w2_ref[...], preferred_element_type=jnp.float32) + b2_ref[...]
    out = _layernorm(y + ffn, g2_ref[...], be2_ref[...])

    if dense_store:
        # Lane-dense store: last block dim N*E is a multiple of 128 -> unmasked vst.
        o_ref[...] = out.reshape(BB, N * E).astype(o_ref.dtype)
    else:
        # Conservative fallback layout (masked stores when E < 128).
        o_ref[...] = out.reshape(BB, N, E).astype(o_ref.dtype)


def _vmem_limit_bytes(headroom=0.75):
    """Generation-aware scoped-VMEM request: 75% of physical per-TC VMEM
    (~96 MiB on v5e/v6e, ~48 MiB on v7x); conservative 48 MiB if unknown."""
    cap = None
    try:
        cap = getattr(pltpu.get_tpu_info(), "vmem_capacity_bytes", None)
    except Exception:
        cap = None
    if not cap:
        cap = 64 * 1024 * 1024
    return int(cap * headroom)


def _pick_batch_block(B, N, target_rows=512):
    """Batch rows fused per grid step.

    BB must divide B and be a multiple of 8 (or equal B) so the lane-dense
    (BB, N*E) output block obeys the (8,128) sublane rule and all in-kernel
    leading-dim regroupings stay sublane-aligned.  Among candidates keeping
    R = BB*N near the MXU-friendly target (256/512-tall fills on v6e/v7x),
    prefer BB <= B/2 so the grid has >= 2 steps and ("parallel",) can shard
    across v7x's two TensorCores."""
    valid = [c for c in range(1, B + 1) if B % c == 0 and (c % 8 == 0 or c == B)]
    fitting = [c for c in valid if c * N <= target_rows] or [min(valid)]
    multi = [c for c in fitting if c <= B // 2]
    return max(multi) if multi else max(fitting)


def transformer_encoder_layer(x, params, *, num_heads,
                              matmul_dtype=jnp.bfloat16, out_dtype=None,
                              batch_block=None, batch_first=False):
    """x: (N, B, E) seq-first (batch_first=False, the module default) or
    (B, N, E) when batch_first=True.  Returns the same layout as the input."""
    x_bne = x if batch_first else jnp.transpose(x, (1, 0, 2))  # one transpose, amortized
    B, N, E = x_bne.shape
    F = params["w1"].shape[-1]
    H = num_heads
    assert E % H == 0, "embed_dim must be divisible by num_heads"
    hd = E // H
    out_dtype = x.dtype if out_dtype is None else out_dtype

    BB = _pick_batch_block(B, N) if batch_block is None else batch_block
    assert B % BB == 0 and (BB % 8 == 0 or BB == B), \
        "batch_block must divide B and be a multiple of 8 (or equal B)"
    grid = (B // BB,)

    cast = lambda w: w.astype(matmul_dtype)   # MXU operands; biases / LN params stay f32
    # Host-side param prep: fused QKV weight/bias, per-head split of Wo.
    wqkv = cast(jnp.concatenate([params["wq"], params["wk"], params["wv"]], axis=1))  # (E, 3E)
    bqkv = jnp.concatenate([params["bq"], params["bk"], params["bv"]], axis=1)        # (1, 3E)
    wo3 = cast(params["wo"]).reshape(H, hd, E)

    weights = (
        wqkv, bqkv, wo3, params["bo"],
        params["ln1_g"], params["ln1_b"],
        cast(params["w1"]), params["b1"], cast(params["w2"]), params["b2"],
        params["ln2_g"], params["ln2_b"],
    )

    def run(dense_store, single_buffer_weights):
        def const_spec(shape):
            nd = len(shape)
            idx = lambda b: (0,) * nd
            if single_buffer_weights:
                # Grid-invariant blocks: single buffer halves their VMEM footprint.
                return pl.BlockSpec(shape, idx, pipeline_mode=pl.Buffered(1))
            return pl.BlockSpec(shape, idx)

        in_specs = [pl.BlockSpec((BB, N, E), lambda b: (b, 0, 0))]
        in_specs += [const_spec(w.shape) for w in weights]

        if dense_store:
            out_shape = jax.ShapeDtypeStruct((B, N * E), out_dtype)
            out_spec = pl.BlockSpec((BB, N * E), lambda b: (b, 0))
        else:
            out_shape = jax.ShapeDtypeStruct((B, N, E), out_dtype)
            out_spec = pl.BlockSpec((BB, N, E), lambda b: (b, 0, 0))

        kernel = functools.partial(encoder_layer_kernel, num_heads=H,
                                   dense_store=dense_store)
        out = pl.pallas_call(
            kernel,
            out_shape=out_shape,
            grid=grid,
            in_specs=in_specs,
            out_specs=out_spec,
            compiler_params=pltpu.CompilerParams(
                dimension_semantics=("parallel",),
                vmem_limit_bytes=_vmem_limit_bytes(),
            ),
        )(x_bne, *weights)
        return out.reshape(B, N, E)

    # Most-optimized layout first (lane-dense stores + single-buffered weights);
    # fall back to the conservative layout on Mosaic builds that reject either
    # the store-side reshape or pipeline_mode.
    try:
        out_bne = run(dense_store=True, single_buffer_weights=True)
    except Exception:  # noqa: BLE001 - lowering support differs across jaxlib builds
        out_bne = run(dense_store=False, single_buffer_weights=False)

    return out_bne if batch_first else jnp.transpose(out_bne, (1, 0, 2))


def reference_jax(x_nbe, params, *, num_heads):
    """Pure-JAX f32 reference mirroring the PyTorch forward (eval mode)."""
    N, B, E = x_nbe.shape
    hd = E // num_heads
    scale = hd ** (-0.5)
    x = jnp.transpose(x_nbe, (1, 0, 2))                      # (B, N, E)
    q = x @ params["wq"] + params["bq"]
    k = x @ params["wk"] + params["bk"]
    v = x @ params["wv"] + params["bv"]
    q = q.reshape(B, N, num_heads, hd)
    k = k.reshape(B, N, num_heads, hd)
    v = v.reshape(B, N, num_heads, hd)
    s = jnp.einsum("bnhd,bmhd->bhnm", q, k) * scale
    p = jax.nn.softmax(s, axis=-1)
    a = jnp.einsum("bhnm,bmhd->bnhd", p, v).reshape(B, N, E)
    a = a @ params["wo"] + params["bo"]
    y = _layernorm(x + a, params["ln1_g"], params["ln1_b"])
    f = jnp.maximum(y @ params["w1"] + params["b1"], 0.0) @ params["w2"] + params["b2"]
    out = _layernorm(y + f, params["ln2_g"], params["ln2_b"])
    return jnp.transpose(out, (1, 0, 2))


def init_params(key, embed_dim, feedforward_dim):
    ks = jax.random.split(key, 8)
    E, F = embed_dim, feedforward_dim
    s = 0.1
    return {
        "wq": s * jax.random.normal(ks[0], (E, E), jnp.float32),
        "bq": s * jax.random.normal(ks[1], (1, E), jnp.float32),
        "wk": s * jax.random.normal(ks[2], (E, E), jnp.float32),
        "bk": s * jax.random.normal(ks[3], (1, E), jnp.float32),
        "wv": s * jax.random.normal(ks[4], (E, E), jnp.float32),
        "bv": s * jax.random.normal(ks[5], (1, E), jnp.float32),
        "wo": s * jax.random.normal(ks[6], (E, E), jnp.float32),
        "bo": jnp.zeros((1, E), jnp.float32),
        "ln1_g": jnp.ones((1, E), jnp.float32),
        "ln1_b": jnp.zeros((1, E), jnp.float32),
        "w1": s * jax.random.normal(ks[7], (E, F), jnp.float32),
        "b1": jnp.zeros((1, F), jnp.float32),
        "w2": s * jax.random.normal(jax.random.fold_in(key, 99), (F, E), jnp.float32),
        "b2": jnp.zeros((1, E), jnp.float32),
        "ln2_g": jnp.ones((1, E), jnp.float32),
        "ln2_b": jnp.zeros((1, E), jnp.float32),
    }


if __name__ == "__main__":
    key = jax.random.PRNGKey(0)
    N, B, E, H, F = 8, 2, 32, 4, 64  # seq, batch, embed, heads, feedforward
    kx, kp = jax.random.split(key)
    x = jax.random.normal(kx, (N, B, E), jnp.float32)        # seq-first (batch_first=False)
    params = init_params(kp, E, F)

    ref = reference_jax(x, params, num_heads=H)

    # f32 MXU path: exact softmax (no approx reciprocal) -> tight functional check.
    out_f32 = transformer_encoder_layer(x, params, num_heads=H,
                                        matmul_dtype=jnp.float32)
    out_f32 = jax.block_until_ready(out_f32)
    assert out_f32.shape == (N, B, E)
    assert jnp.allclose(out_f32, ref, atol=1e-2, rtol=1e-2), "f32 path mismatch vs reference"

    # bf16 MXU path (recommended production setting on v5e/v6e/v7x), bf16 output stream.
    out_bf16 = transformer_encoder_layer(x, params, num_heads=H,
                                         matmul_dtype=jnp.bfloat16,
                                         out_dtype=jnp.bfloat16)
    out_bf16 = jax.block_until_ready(out_bf16)
    assert out_bf16.shape == (N, B, E)
    assert jnp.allclose(out_bf16.astype(jnp.float32), ref, atol=8e-2, rtol=8e-2), \
        "bf16 path mismatch vs reference"

    print("KERNEL_OK")
</pallas_src>

<mosaic_0001>
module attributes {stable_mosaic.version = 11 : i64} {
  func.func @encoder_layer_kernel(%arg0: i32, %arg1: memref<2x8x32xf32, #tpu.memory_space<vmem>>, %arg2: memref<32x96xf32, #tpu.memory_space<vmem>>, %arg3: memref<1x96xf32, #tpu.memory_space<vmem>>, %arg4: memref<4x8x32xf32, #tpu.memory_space<vmem>>, %arg5: memref<1x32xf32, #tpu.memory_space<vmem>>, %arg6: memref<1x32xf32, #tpu.memory_space<vmem>>, %arg7: memref<1x32xf32, #tpu.memory_space<vmem>>, %arg8: memref<32x64xf32, #tpu.memory_space<vmem>>, %arg9: memref<1x64xf32, #tpu.memory_space<vmem>>, %arg10: memref<64x32xf32, #tpu.memory_space<vmem>>, %arg11: memref<1x32xf32, #tpu.memory_space<vmem>>, %arg12: memref<1x32xf32, #tpu.memory_space<vmem>>, %arg13: memref<1x32xf32, #tpu.memory_space<vmem>>, %arg14: memref<2x256xf32, #tpu.memory_space<vmem>>) attributes {dimension_semantics = [#tpu.dimension_semantics<parallel>], iteration_bounds = array<i64: 1>, scalar_prefetch = 0 : i64, scratch_operands = 0 : i64, tpu.core_type = #tpu.core_type<tc>, window_params = [{transform_indices = @transform_0, window_bounds = array<i64: 2, 8, 32>}, {pipeline_mode = #tpu.pipeline_mode<synchronous>, transform_indices = @transform_1, window_bounds = array<i64: 32, 96>}, {pipeline_mode = #tpu.pipeline_mode<synchronous>, transform_indices = @transform_2, window_bounds = array<i64: 1, 96>}, {pipeline_mode = #tpu.pipeline_mode<synchronous>, transform_indices = @transform_3, window_bounds = array<i64: 4, 8, 32>}, {pipeline_mode = #tpu.pipeline_mode<synchronous>, transform_indices = @transform_4, window_bounds = array<i64: 1, 32>}, {pipeline_mode = #tpu.pipeline_mode<synchronous>, transform_indices = @transform_5, window_bounds = array<i64: 1, 32>}, {pipeline_mode = #tpu.pipeline_mode<synchronous>, transform_indices = @transform_6, window_bounds = array<i64: 1, 32>}, {pipeline_mode = #tpu.pipeline_mode<synchronous>, transform_indices = @transform_7, window_bounds = array<i64: 32, 64>}, {pipeline_mode = #tpu.pipeline_mode<synchronous>, transform_indices = @transform_8, window_bounds = array<i64: 1, 64>}, {pipeline_mode = #tpu.pipeline_mode<synchronous>, transform_indices = @transform_9, window_bounds = array<i64: 64, 32>}, {pipeline_mode = #tpu.pipeline_mode<synchronous>, transform_indices = @transform_10, window_bounds = array<i64: 1, 32>}, {pipeline_mode = #tpu.pipeline_mode<synchronous>, transform_indices = @transform_11, window_bounds = array<i64: 1, 32>}, {pipeline_mode = #tpu.pipeline_mode<synchronous>, transform_indices = @transform_12, window_bounds = array<i64: 1, 32>}, {transform_indices = @transform_13, window_bounds = array<i64: 2, 256>}]} {
    %c0 = arith.constant 0 : index
    %c0_0 = arith.constant 0 : index
    %c0_1 = arith.constant 0 : index
    %0 = vector.load %arg1[%c0, %c0_0, %c0_1] : memref<2x8x32xf32, #tpu.memory_space<vmem>>, vector<2x8x32xf32>
    %1 = vector.shape_cast %0 : vector<2x8x32xf32> to vector<16x32xf32>
    %c0_2 = arith.constant 0 : index
    %c0_3 = arith.constant 0 : index
    %2 = vector.load %arg2[%c0_2, %c0_3] : memref<32x96xf32, #tpu.memory_space<vmem>>, vector<32x96xf32>
    %cst = arith.constant dense<0.000000e+00> : vector<16x96xf32>
    %3 = tpu.matmul %1, %2, %cst {dimension_numbers = #tpu.dot_dimension_numbers<[1], [0], [0], [1], [0, 0, 1, 1], [], []>} : vector<16x32xf32>, vector<32x96xf32>, vector<16x96xf32> -> vector<16x96xf32>
    %c0_4 = arith.constant 0 : index
    %c0_5 = arith.constant 0 : index
    %4 = vector.load %arg3[%c0_4, %c0_5] : memref<1x96xf32, #tpu.memory_space<vmem>>, vector<1x96xf32>
    %5 = vector.broadcast %4 : vector<1x96xf32> to vector<16x96xf32>
    %6 = arith.addf %3, %5 : vector<16x96xf32>
    %7 = vector.extract_strided_slice %6 {offsets = [0, 0], sizes = [16, 32], strides = [1, 1]} : vector<16x96xf32> to vector<16x32xf32>
    %cst_6 = arith.constant 0.353553385 : f32
    %8 = vector.broadcast %cst_6 : f32 to vector<16x32xf32>
    %9 = arith.mulf %7, %8 : vector<16x32xf32>
    %10 = vector.extract_strided_slice %6 {offsets = [0, 32], sizes = [16, 32], strides = [1, 1]} : vector<16x96xf32> to vector<16x32xf32>
    %11 = vector.extract_strided_slice %6 {offsets = [0, 64], sizes = [16, 32], strides = [1, 1]} : vector<16x96xf32> to vector<16x32xf32>
    %12 = vector.extract_strided_slice %9 {offsets = [0, 0], sizes = [16, 8], strides = [1, 1]} : vector<16x32xf32> to vector<16x8xf32>
    %13 = vector.shape_cast %12 : vector<16x8xf32> to vector<2x8x8xf32>
    %14 = vector.extract_strided_slice %9 {offsets = [0, 8], sizes = [16, 8], strides = [1, 1]} : vector<16x32xf32> to vector<16x8xf32>
    %15 = vector.shape_cast %14 : vector<16x8xf32> to vector<2x8x8xf32>
    %16 = vector.extract_strided_slice %9 {offsets = [0, 16], sizes = [16, 8], strides = [1, 1]} : vector<16x32xf32> to vector<16x8xf32>
    %17 = vector.shape_cast %16 : vector<16x8xf32> to vector<2x8x8xf32>
    %18 = vector.extract_strided_slice %9 {offsets = [0, 24], sizes = [16, 8], strides = [1, 1]} : vector<16x32xf32> to vector<16x8xf32>
    %19 = vector.shape_cast %18 : vector<16x8xf32> to vector<2x8x8xf32>
    %20 = tpu.concatenate %13, %15, %17, %19 in 0 : vector<2x8x8xf32>, vector<2x8x8xf32>, vector<2x8x8xf32>, vector<2x8x8xf32> -> vector<8x8x8xf32>
    %21 = vector.extract_strided_slice %10 {offsets = [0, 0], sizes = [16, 8], strides = [1, 1]} : vector<16x32xf32> to vector<16x8xf32>
    %22 = vector.shape_cast %21 : vector<16x8xf32> to vector<2x8x8xf32>
    %23 = vector.extract_strided_slice %10 {offsets = [0, 8], sizes = [16, 8], strides = [1, 1]} : vector<16x32xf32> to vector<16x8xf32>
    %24 = vector.shape_cast %23 : vector<16x8xf32> to vector<2x8x8xf32>
    %25 = vector.extract_strided_slice %10 {offsets = [0, 16], sizes = [16, 8], strides = [1, 1]} : vector<16x32xf32> to vector<16x8xf32>
    %26 = vector.shape_cast %25 : vector<16x8xf32> to vector<2x8x8xf32>
    %27 = vector.extract_strided_slice %10 {offsets = [0, 24], sizes = [16, 8], strides = [1, 1]} : vector<16x32xf32> to vector<16x8xf32>
    %28 = vector.shape_cast %27 : vector<16x8xf32> to vector<2x8x8xf32>
    %29 = tpu.concatenate %22, %24, %26, %28 in 0 : vector<2x8x8xf32>, vector<2x8x8xf32>, vector<2x8x8xf32>, vector<2x8x8xf32> -> vector<8x8x8xf32>
    %30 = vector.extract_strided_slice %11 {offsets = [0, 0], sizes = [16, 8], strides = [1, 1]} : vector<16x32xf32> to vector<16x8xf32>
    %31 = vector.shape_cast %30 : vector<16x8xf32> to vector<2x8x8xf32>
    %32 = vector.extract_strided_slice %11 {offsets = [0, 8], sizes = [16, 8], strides = [1, 1]} : vector<16x32xf32> to vector<16x8xf32>
    %33 = vector.shape_cast %32 : vector<16x8xf32> to vector<2x8x8xf32>
    %34 = vector.extract_strided_slice %11 {offsets = [0, 16], sizes = [16, 8], strides = [1, 1]} : vector<16x32xf32> to vector<16x8xf32>
    %35 = vector.shape_cast %34 : vector<16x8xf32> to vector<2x8x8xf32>
    %36 = vector.extract_strided_slice %11 {offsets = [0, 24], sizes = [16, 8], strides = [1, 1]} : vector<16x32xf32> to vector<16x8xf32>
    %37 = vector.shape_cast %36 : vector<16x8xf32> to vector<2x8x8xf32>
    %38 = tpu.concatenate %31, %33, %35, %37 in 0 : vector<2x8x8xf32>, vector<2x8x8xf32>, vector<2x8x8xf32>, vector<2x8x8xf32> -> vector<8x8x8xf32>
    %cst_7 = arith.constant dense<0.000000e+00> : vector<8x8x8xf32>
    %39 = tpu.matmul %20, %29, %cst_7 {dimension_numbers = #tpu.dot_dimension_numbers<[2], [2], [1], [1], [0, 0, 0, 1, 1, 1], [0], [0]>} : vector<8x8x8xf32>, vector<8x8x8xf32>, vector<8x8x8xf32> -> vector<8x8x8xf32>
    %cst_8 = arith.constant dense<0xFF800000> : vector<8x8xf32>
    %40 = vector.multi_reduction <maximumf>, %39, %cst_8 [2] : vector<8x8x8xf32> to vector<8x8xf32>
    %41 = vector.shape_cast %40 : vector<8x8xf32> to vector<8x8x1xf32>
    %42 = vector.broadcast %41 : vector<8x8x1xf32> to vector<8x8x8xf32>
    %43 = arith.subf %39, %42 : vector<8x8x8xf32>
    %44 = math.exp %43 : vector<8x8x8xf32>
    %cst_9 = arith.constant dense<0.000000e+00> : vector<8x8xf32>
    %45 = vector.multi_reduction <add>, %44, %cst_9 [2] : vector<8x8x8xf32> to vector<8x8xf32>
    %46 = vector.shape_cast %45 : vector<8x8xf32> to vector<8x8x1xf32>
    %47 = vector.broadcast %46 : vector<8x8x1xf32> to vector<8x8x8xf32>
    %48 = arith.divf %44, %47 : vector<8x8x8xf32>
    %cst_10 = arith.constant dense<0.000000e+00> : vector<8x8x8xf32>
    %49 = tpu.matmul %48, %38, %cst_10 {dimension_numbers = #tpu.dot_dimension_numbers<[2], [1], [1], [2], [0, 0, 0, 1, 1, 2], [0], [0]>} : vector<8x8x8xf32>, vector<8x8x8xf32>, vector<8x8x8xf32> -> vector<8x8x8xf32>
    %50 = vector.shape_cast %49 : vector<8x8x8xf32> to vector<4x16x8xf32>
    %c0_11 = arith.constant 0 : index
    %c0_12 = arith.constant 0 : index
    %c0_13 = arith.constant 0 : index
    %51 = vector.load %arg4[%c0_11, %c0_12, %c0_13] : memref<4x8x32xf32, #tpu.memory_space<vmem>>, vector<4x8x32xf32>
    %cst_14 = arith.constant dense<0.000000e+00> : vector<4x16x32xf32>
    %52 = tpu.matmul %50, %51, %cst_14 {dimension_numbers = #tpu.dot_dimension_numbers<[2], [1], [1], [2], [0, 0, 0, 1, 1, 2], [0], [0]>} : vector<4x16x8xf32>, vector<4x8x32xf32>, vector<4x16x32xf32> -> vector<4x16x32xf32>
    %c0_15 = arith.constant 0 : index
    %c0_16 = arith.constant 0 : index
    %53 = vector.load %arg5[%c0_15, %c0_16] : memref<1x32xf32, #tpu.memory_space<vmem>>, vector<1x32xf32>
    %54 = vector.extract_strided_slice %52 {offsets = [0, 0, 0], sizes = [1, 16, 32], strides = [1, 1, 1]} : vector<4x16x32xf32> to vector<1x16x32xf32>
    %55 = vector.shape_cast %54 : vector<1x16x32xf32> to vector<16x32xf32>
    %56 = vector.broadcast %53 : vector<1x32xf32> to vector<16x32xf32>
    %57 = arith.addf %56, %55 : vector<16x32xf32>
    %58 = vector.extract_strided_slice %52 {offsets = [1, 0, 0], sizes = [1, 16, 32], strides = [1, 1, 1]} : vector<4x16x32xf32> to vector<1x16x32xf32>
    %59 = vector.shape_cast %58 : vector<1x16x32xf32> to vector<16x32xf32>
    %60 = arith.addf %57, %59 : vector<16x32xf32>
    %61 = vector.extract_strided_slice %52 {offsets = [2, 0, 0], sizes = [1, 16, 32], strides = [1, 1, 1]} : vector<4x16x32xf32> to vector<1x16x32xf32>
    %62 = vector.shape_cast %61 : vector<1x16x32xf32> to vector<16x32xf32>
    %63 = arith.addf %60, %62 : vector<16x32xf32>
    %64 = vector.extract_strided_slice %52 {offsets = [3, 0, 0], sizes = [1, 16, 32], strides = [1, 1, 1]} : vector<4x16x32xf32> to vector<1x16x32xf32>
    %65 = vector.shape_cast %64 : vector<1x16x32xf32> to vector<16x32xf32>
    %66 = arith.addf %63, %65 : vector<16x32xf32>
    %67 = arith.addf %1, %66 : vector<16x32xf32>
    %c0_17 = arith.constant 0 : index
    %c0_18 = arith.constant 0 : index
    %68 = vector.load %arg6[%c0_17, %c0_18] : memref<1x32xf32, #tpu.memory_space<vmem>>, vector<1x32xf32>
    %c0_19 = arith.constant 0 : index
    %c0_20 = arith.constant 0 : index
    %69 = vector.load %arg7[%c0_19, %c0_20] : memref<1x32xf32, #tpu.memory_space<vmem>>, vector<1x32xf32>
    %cst_21 = arith.constant dense<0.000000e+00> : vector<16xf32>
    %70 = vector.multi_reduction <add>, %67, %cst_21 [1] : vector<16x32xf32> to vector<16xf32>
    %71 = vector.shape_cast %70 : vector<16xf32> to vector<16x1xf32>
    %cst_22 = arith.constant 3.200000e+01 : f32
    %72 = vector.broadcast %cst_22 : f32 to vector<16x1xf32>
    %73 = arith.divf %71, %72 : vector<16x1xf32>
    %74 = vector.broadcast %73 : vector<16x1xf32> to vector<16x32xf32>
    %75 = arith.subf %67, %74 : vector<16x32xf32>
    %76 = arith.mulf %75, %75 : vector<16x32xf32>
    %cst_23 = arith.constant dense<0.000000e+00> : vector<16xf32>
    %77 = vector.multi_reduction <add>, %76, %cst_23 [1] : vector<16x32xf32> to vector<16xf32>
    %78 = vector.shape_cast %77 : vector<16xf32> to vector<16x1xf32>
    %cst_24 = arith.constant 3.200000e+01 : f32
    %79 = vector.broadcast %cst_24 : f32 to vector<16x1xf32>
    %80 = arith.divf %78, %79 : vector<16x1xf32>
    %81 = vector.broadcast %73 : vector<16x1xf32> to vector<16x32xf32>
    %82 = arith.subf %67, %81 : vector<16x32xf32>
    %cst_25 = arith.constant 9.99999974E-6 : f32
    %83 = vector.broadcast %cst_25 : f32 to vector<16x1xf32>
    %84 = arith.addf %80, %83 : vector<16x1xf32>
    %85 = math.rsqrt %84 : vector<16x1xf32>
    %86 = vector.broadcast %85 : vector<16x1xf32> to vector<16x32xf32>
    %87 = arith.mulf %82, %86 : vector<16x32xf32>
    %88 = vector.broadcast %68 : vector<1x32xf32> to vector<16x32xf32>
    %89 = arith.mulf %87, %88 : vector<16x32xf32>
    %90 = vector.broadcast %69 : vector<1x32xf32> to vector<16x32xf32>
    %91 = arith.addf %89, %90 : vector<16x32xf32>
    %c0_26 = arith.constant 0 : index
    %c0_27 = arith.constant 0 : index
    %92 = vector.load %arg8[%c0_26, %c0_27] : memref<32x64xf32, #tpu.memory_space<vmem>>, vector<32x64xf32>
    %cst_28 = arith.constant dense<0.000000e+00> : vector<16x64xf32>
    %93 = tpu.matmul %91, %92, %cst_28 {dimension_numbers = #tpu.dot_dimension_numbers<[1], [0], [0], [1], [0, 0, 1, 1], [], []>} : vector<16x32xf32>, vector<32x64xf32>, vector<16x64xf32> -> vector<16x64xf32>
    %c0_29 = arith.constant 0 : index
    %c0_30 = arith.constant 0 : index
    %94 = vector.load %arg9[%c0_29, %c0_30] : memref<1x64xf32, #tpu.memory_space<vmem>>, vector<1x64xf32>
    %95 = vector.broadcast %94 : vector<1x64xf32> to vector<16x64xf32>
    %96 = arith.addf %93, %95 : vector<16x64xf32>
    %cst_31 = arith.constant 0.000000e+00 : f32
    %97 = vector.broadcast %cst_31 : f32 to vector<16x64xf32>
    %98 = arith.maximumf %96, %97 : vector<16x64xf32>
    %c0_32 = arith.constant 0 : index
    %c0_33 = arith.constant 0 : index
    %99 = vector.load %arg10[%c0_32, %c0_33] : memref<64x32xf32, #tpu.memory_space<vmem>>, vector<64x32xf32>
    %cst_34 = arith.constant dense<0.000000e+00> : vector<16x32xf32>
    %100 = tpu.matmul %98, %99, %cst_34 {dimension_numbers = #tpu.dot_dimension_numbers<[1], [0], [0], [1], [0, 0, 1, 1], [], []>} : vector<16x64xf32>, vector<64x32xf32>, vector<16x32xf32> -> vector<16x32xf32>
    %c0_35 = arith.constant 0 : index
    %c0_36 = arith.constant 0 : index
    %101 = vector.load %arg11[%c0_35, %c0_36] : memref<1x32xf32, #tpu.memory_space<vmem>>, vector<1x32xf32>
    %102 = vector.broadcast %101 : vector<1x32xf32> to vector<16x32xf32>
    %103 = arith.addf %100, %102 : vector<16x32xf32>
    %104 = arith.addf %91, %103 : vector<16x32xf32>
    %c0_37 = arith.constant 0 : index
    %c0_38 = arith.constant 0 : index
    %105 = vector.load %arg12[%c0_37, %c0_38] : memref<1x32xf32, #tpu.memory_space<vmem>>, vector<1x32xf32>
    %c0_39 = arith.constant 0 : index
    %c0_40 = arith.constant 0 : index
    %106 = vector.load %arg13[%c0_39, %c0_40] : memref<1x32xf32, #tpu.memory_space<vmem>>, vector<1x32xf32>
    %cst_41 = arith.constant dense<0.000000e+00> : vector<16xf32>
    %107 = vector.multi_reduction <add>, %104, %cst_41 [1] : vector<16x32xf32> to vector<16xf32>
    %108 = vector.shape_cast %107 : vector<16xf32> to vector<16x1xf32>
    %cst_42 = arith.constant 3.200000e+01 : f32
    %109 = vector.broadcast %cst_42 : f32 to vector<16x1xf32>
    %110 = arith.divf %108, %109 : vector<16x1xf32>
    %111 = vector.broadcast %110 : vector<16x1xf32> to vector<16x32xf32>
    %112 = arith.subf %104, %111 : vector<16x32xf32>
    %113 = arith.mulf %112, %112 : vector<16x32xf32>
    %cst_43 = arith.constant dense<0.000000e+00> : vector<16xf32>
    %114 = vector.multi_reduction <add>, %113, %cst_43 [1] : vector<16x32xf32> to vector<16xf32>
    %115 = vector.shape_cast %114 : vector<16xf32> to vector<16x1xf32>
    %cst_44 = arith.constant 3.200000e+01 : f32
    %116 = vector.broadcast %cst_44 : f32 to vector<16x1xf32>
    %117 = arith.divf %115, %116 : vector<16x1xf32>
    %118 = vector.broadcast %110 : vector<16x1xf32> to vector<16x32xf32>
    %119 = arith.subf %104, %118 : vector<16x32xf32>
    %cst_45 = arith.constant 9.99999974E-6 : f32
    %120 = vector.broadcast %cst_45 : f32 to vector<16x1xf32>
    %121 = arith.addf %117, %120 : vector<16x1xf32>
    %122 = math.rsqrt %121 : vector<16x1xf32>
    %123 = vector.broadcast %122 : vector<16x1xf32> to vector<16x32xf32>
    %124 = arith.mulf %119, %123 : vector<16x32xf32>
    %125 = vector.broadcast %105 : vector<1x32xf32> to vector<16x32xf32>
    %126 = arith.mulf %124, %125 : vector<16x32xf32>
    %127 = vector.broadcast %106 : vector<1x32xf32> to vector<16x32xf32>
    %128 = arith.addf %126, %127 : vector<16x32xf32>
    %129 = vector.shape_cast %128 : vector<16x32xf32> to vector<2x256xf32>
    %c0_46 = arith.constant 0 : index
    %c0_47 = arith.constant 0 : index
    %130 = vector.load %arg14[%c0_46, %c0_47] : memref<2x256xf32, #tpu.memory_space<vmem>>, vector<2x256xf32>
    tpu.vector_store %arg14[%c0_46, %c0_47], %129 {strides = array<i32>} : memref<2x256xf32, #tpu.memory_space<vmem>>, vector<2x256xf32>,
    return
  }
  func.func @transform_0(%arg0: i32) -> (i32, i32, i32) {
    %c0_i32 = arith.constant 0 : i32
    %c0_i32_0 = arith.constant 0 : i32
    %c0_i32_1 = arith.constant 0 : i32
    return %arg0, %c0_i32, %c0_i32_0 : i32, i32, i32
  }
  func.func @transform_1(%arg0: i32) -> (i32, i32) {
    %c0_i32 = arith.constant 0 : i32
    %c0_i32_0 = arith.constant 0 : i32
    %c0_i32_1 = arith.constant 0 : i32
    return %c0_i32, %c0_i32_0 : i32, i32
  }
  func.func @transform_2(%arg0: i32) -> (i32, i32) {
    %c0_i32 = arith.constant 0 : i32
    %c0_i32_0 = arith.constant 0 : i32
    %c0_i32_1 = arith.constant 0 : i32
    return %c0_i32, %c0_i32_0 : i32, i32
  }
  func.func @transform_3(%arg0: i32) -> (i32, i32, i32) {
    %c0_i32 = arith.constant 0 : i32
    %c0_i32_0 = arith.constant 0 : i32
    %c0_i32_1 = arith.constant 0 : i32
    %c0_i32_2 = arith.constant 0 : i32
    return %c0_i32, %c0_i32_0, %c0_i32_1 : i32, i32, i32
  }
  func.func @transform_4(%arg0: i32) -> (i32, i32) {
    %c0_i32 = arith.constant 0 : i32
    %c0_i32_0 = arith.constant 0 : i32
    %c0_i32_1 = arith.constant 0 : i32
    return %c0_i32, %c0_i32_0 : i32, i32
  }
  func.func @transform_5(%arg0: i32) -> (i32, i32) {
    %c0_i32 = arith.constant 0 : i32
    %c0_i32_0 = arith.constant 0 : i32
    %c0_i32_1 = arith.constant 0 : i32
    return %c0_i32, %c0_i32_0 : i32, i32
  }
  func.func @transform_6(%arg0: i32) -> (i32, i32) {
    %c0_i32 = arith.constant 0 : i32
    %c0_i32_0 = arith.constant 0 : i32
    %c0_i32_1 = arith.constant 0 : i32
    return %c0_i32, %c0_i32_0 : i32, i32
  }
  func.func @transform_7(%arg0: i32) -> (i32, i32) {
    %c0_i32 = arith.constant 0 : i32
    %c0_i32_0 = arith.constant 0 : i32
    %c0_i32_1 = arith.constant 0 : i32
    return %c0_i32, %c0_i32_0 : i32, i32
  }
  func.func @transform_8(%arg0: i32) -> (i32, i32) {
    %c0_i32 = arith.constant 0 : i32
    %c0_i32_0 = arith.constant 0 : i32
    %c0_i32_1 = arith.constant 0 : i32
    return %c0_i32, %c0_i32_0 : i32, i32
  }
  func.func @transform_9(%arg0: i32) -> (i32, i32) {
    %c0_i32 = arith.constant 0 : i32
    %c0_i32_0 = arith.constant 0 : i32
    %c0_i32_1 = arith.constant 0 : i32
    return %c0_i32, %c0_i32_0 : i32, i32
  }
  func.func @transform_10(%arg0: i32) -> (i32, i32) {
    %c0_i32 = arith.constant 0 : i32
    %c0_i32_0 = arith.constant 0 : i32
    %c0_i32_1 = arith.constant 0 : i32
    return %c0_i32, %c0_i32_0 : i32, i32
  }
  func.func @transform_11(%arg0: i32) -> (i32, i32) {
    %c0_i32 = arith.constant 0 : i32
    %c0_i32_0 = arith.constant 0 : i32
    %c0_i32_1 = arith.constant 0 : i32
    return %c0_i32, %c0_i32_0 : i32, i32
  }
  func.func @transform_12(%arg0: i32) -> (i32, i32) {
    %c0_i32 = arith.constant 0 : i32
    %c0_i32_0 = arith.constant 0 : i32
    %c0_i32_1 = arith.constant 0 : i32
    return %c0_i32, %c0_i32_0 : i32, i32
  }
  func.func @transform_13(%arg0: i32) -> (i32, i32) {
    %c0_i32 = arith.constant 0 : i32
    %c0_i32_0 = arith.constant 0 : i32
    return %arg0, %c0_i32 : i32, i32
  }
}

module attributes {stable_mosaic.version = 11 : i64} {
  func.func @encoder_layer_kernel(%arg0: i32, %arg1: memref<2x8x32xf32, #tpu.memory_space<vmem>>, %arg2: memref<32x96xf32, #tpu.memory_space<vmem>>, %arg3: memref<1x96xf32, #tpu.memory_space<vmem>>, %arg4: memref<4x8x32xf32, #tpu.memory_space<vmem>>, %arg5: memref<1x32xf32, #tpu.memory_space<vmem>>, %arg6: memref<1x32xf32, #tpu.memory_space<vmem>>, %arg7: memref<1x32xf32, #tpu.memory_space<vmem>>, %arg8: memref<32x64xf32, #tpu.memory_space<vmem>>, %arg9: memref<1x64xf32, #tpu.memory_space<vmem>>, %arg10: memref<64x32xf32, #tpu.memory_space<vmem>>, %arg11: memref<1x32xf32, #tpu.memory_space<vmem>>, %arg12: memref<1x32xf32, #tpu.memory_space<vmem>>, %arg13: memref<1x32xf32, #tpu.memory_space<vmem>>, %arg14: memref<2x8x32xf32, #tpu.memory_space<vmem>>) attributes {dimension_semantics = [#tpu.dimension_semantics<parallel>], iteration_bounds = array<i64: 1>, scalar_prefetch = 0 : i64, scratch_operands = 0 : i64, tpu.core_type = #tpu.core_type<tc>, window_params = [{transform_indices = @transform_0, window_bounds = array<i64: 2, 8, 32>}, {pipeline_mode = #tpu.pipeline_mode<synchronous>, transform_indices = @transform_1, window_bounds = array<i64: 32, 96>}, {pipeline_mode = #tpu.pipeline_mode<synchronous>, transform_indices = @transform_2, window_bounds = array<i64: 1, 96>}, {pipeline_mode = #tpu.pipeline_mode<synchronous>, transform_indices = @transform_3, window_bounds = array<i64: 4, 8, 32>}, {pipeline_mode = #tpu.pipeline_mode<synchronous>, transform_indices = @transform_4, window_bounds = array<i64: 1, 32>}, {pipeline_mode = #tpu.pipeline_mode<synchronous>, transform_indices = @transform_5, window_bounds = array<i64: 1, 32>}, {pipeline_mode = #tpu.pipeline_mode<synchronous>, transform_indices = @transform_6, window_bounds = array<i64: 1, 32>}, {pipeline_mode = #tpu.pipeline_mode<synchronous>, transform_indices = @transform_7, window_bounds = array<i64: 32, 64>}, {pipeline_mode = #tpu.pipeline_mode<synchronous>, transform_indices = @transform_8, window_bounds = array<i64: 1, 64>}, {pipeline_mode = #tpu.pipeline_mode<synchronous>, transform_indices = @transform_9, window_bounds = array<i64: 64, 32>}, {pipeline_mode = #tpu.pipeline_mode<synchronous>, transform_indices = @transform_10, window_bounds = array<i64: 1, 32>}, {pipeline_mode = #tpu.pipeline_mode<synchronous>, transform_indices = @transform_11, window_bounds = array<i64: 1, 32>}, {pipeline_mode = #tpu.pipeline_mode<synchronous>, transform_indices = @transform_12, window_bounds = array<i64: 1, 32>}, {transform_indices = @transform_13, window_bounds = array<i64: 2, 8, 32>}]} {
    %c0 = arith.constant 0 : index
    %c0_0 = arith.constant 0 : index
    %c0_1 = arith.constant 0 : index
    %0 = vector.load %arg1[%c0, %c0_0, %c0_1] : memref<2x8x32xf32, #tpu.memory_space<vmem>>, vector<2x8x32xf32>
    %1 = vector.shape_cast %0 : vector<2x8x32xf32> to vector<16x32xf32>
    %c0_2 = arith.constant 0 : index
    %c0_3 = arith.constant 0 : index
    %2 = vector.load %arg2[%c0_2, %c0_3] : memref<32x96xf32, #tpu.memory_space<vmem>>, vector<32x96xf32>
    %cst = arith.constant dense<0.000000e+00> : vector<16x96xf32>
    %3 = tpu.matmul %1, %2, %cst {dimension_numbers = #tpu.dot_dimension_numbers<[1], [0], [0], [1], [0, 0, 1, 1], [], []>} : vector<16x32xf32>, vector<32x96xf32>, vector<16x96xf32> -> vector<16x96xf32>
    %c0_4 = arith.constant 0 : index
    %c0_5 = arith.constant 0 : index
    %4 = vector.load %arg3[%c0_4, %c0_5] : memref<1x96xf32, #tpu.memory_space<vmem>>, vector<1x96xf32>
    %5 = vector.broadcast %4 : vector<1x96xf32> to vector<16x96xf32>
    %6 = arith.addf %3, %5 : vector<16x96xf32>
    %7 = vector.extract_strided_slice %6 {offsets = [0, 0], sizes = [16, 32], strides = [1, 1]} : vector<16x96xf32> to vector<16x32xf32>
    %cst_6 = arith.constant 0.353553385 : f32
    %8 = vector.broadcast %cst_6 : f32 to vector<16x32xf32>
    %9 = arith.mulf %7, %8 : vector<16x32xf32>
    %10 = vector.extract_strided_slice %6 {offsets = [0, 32], sizes = [16, 32], strides = [1, 1]} : vector<16x96xf32> to vector<16x32xf32>
    %11 = vector.extract_strided_slice %6 {offsets = [0, 64], sizes = [16, 32], strides = [1, 1]} : vector<16x96xf32> to vector<16x32xf32>
    %12 = vector.extract_strided_slice %9 {offsets = [0, 0], sizes = [16, 8], strides = [1, 1]} : vector<16x32xf32> to vector<16x8xf32>
    %13 = vector.shape_cast %12 : vector<16x8xf32> to vector<2x8x8xf32>
    %14 = vector.extract_strided_slice %9 {offsets = [0, 8], sizes = [16, 8], strides = [1, 1]} : vector<16x32xf32> to vector<16x8xf32>
    %15 = vector.shape_cast %14 : vector<16x8xf32> to vector<2x8x8xf32>
    %16 = vector.extract_strided_slice %9 {offsets = [0, 16], sizes = [16, 8], strides = [1, 1]} : vector<16x32xf32> to vector<16x8xf32>
    %17 = vector.shape_cast %16 : vector<16x8xf32> to vector<2x8x8xf32>
    %18 = vector.extract_strided_slice %9 {offsets = [0, 24], sizes = [16, 8], strides = [1, 1]} : vector<16x32xf32> to vector<16x8xf32>
    %19 = vector.shape_cast %18 : vector<16x8xf32> to vector<2x8x8xf32>
    %20 = tpu.concatenate %13, %15, %17, %19 in 0 : vector<2x8x8xf32>, vector<2x8x8xf32>, vector<2x8x8xf32>, vector<2x8x8xf32> -> vector<8x8x8xf32>
    %21 = vector.extract_strided_slice %10 {offsets = [0, 0], sizes = [16, 8], strides = [1, 1]} : vector<16x32xf32> to vector<16x8xf32>
    %22 = vector.shape_cast %21 : vector<16x8xf32> to vector<2x8x8xf32>
    %23 = vector.extract_strided_slice %10 {offsets = [0, 8], sizes = [16, 8], strides = [1, 1]} : vector<16x32xf32> to vector<16x8xf32>
    %24 = vector.shape_cast %23 : vector<16x8xf32> to vector<2x8x8xf32>
    %25 = vector.extract_strided_slice %10 {offsets = [0, 16], sizes = [16, 8], strides = [1, 1]} : vector<16x32xf32> to vector<16x8xf32>
    %26 = vector.shape_cast %25 : vector<16x8xf32> to vector<2x8x8xf32>
    %27 = vector.extract_strided_slice %10 {offsets = [0, 24], sizes = [16, 8], strides = [1, 1]} : vector<16x32xf32> to vector<16x8xf32>
    %28 = vector.shape_cast %27 : vector<16x8xf32> to vector<2x8x8xf32>
    %29 = tpu.concatenate %22, %24, %26, %28 in 0 : vector<2x8x8xf32>, vector<2x8x8xf32>, vector<2x8x8xf32>, vector<2x8x8xf32> -> vector<8x8x8xf32>
    %30 = vector.extract_strided_slice %11 {offsets = [0, 0], sizes = [16, 8], strides = [1, 1]} : vector<16x32xf32> to vector<16x8xf32>
    %31 = vector.shape_cast %30 : vector<16x8xf32> to vector<2x8x8xf32>
    %32 = vector.extract_strided_slice %11 {offsets = [0, 8], sizes = [16, 8], strides = [1, 1]} : vector<16x32xf32> to vector<16x8xf32>
    %33 = vector.shape_cast %32 : vector<16x8xf32> to vector<2x8x8xf32>
    %34 = vector.extract_strided_slice %11 {offsets = [0, 16], sizes = [16, 8], strides = [1, 1]} : vector<16x32xf32> to vector<16x8xf32>
    %35 = vector.shape_cast %34 : vector<16x8xf32> to vector<2x8x8xf32>
    %36 = vector.extract_strided_slice %11 {offsets = [0, 24], sizes = [16, 8], strides = [1, 1]} : vector<16x32xf32> to vector<16x8xf32>
    %37 = vector.shape_cast %36 : vector<16x8xf32> to vector<2x8x8xf32>
    %38 = tpu.concatenate %31, %33, %35, %37 in 0 : vector<2x8x8xf32>, vector<2x8x8xf32>, vector<2x8x8xf32>, vector<2x8x8xf32> -> vector<8x8x8xf32>
    %cst_7 = arith.constant dense<0.000000e+00> : vector<8x8x8xf32>
    %39 = tpu.matmul %20, %29, %cst_7 {dimension_numbers = #tpu.dot_dimension_numbers<[2], [2], [1], [1], [0, 0, 0, 1, 1, 1], [0], [0]>} : vector<8x8x8xf32>, vector<8x8x8xf32>, vector<8x8x8xf32> -> vector<8x8x8xf32>
    %cst_8 = arith.constant dense<0xFF800000> : vector<8x8xf32>
    %40 = vector.multi_reduction <maximumf>, %39, %cst_8 [2] : vector<8x8x8xf32> to vector<8x8xf32>
    %41 = vector.shape_cast %40 : vector<8x8xf32> to vector<8x8x1xf32>
    %42 = vector.broadcast %41 : vector<8x8x1xf32> to vector<8x8x8xf32>
    %43 = arith.subf %39, %42 : vector<8x8x8xf32>
    %44 = math.exp %43 : vector<8x8x8xf32>
    %cst_9 = arith.constant dense<0.000000e+00> : vector<8x8xf32>
    %45 = vector.multi_reduction <add>, %44, %cst_9 [2] : vector<8x8x8xf32> to vector<8x8xf32>
    %46 = vector.shape_cast %45 : vector<8x8xf32> to vector<8x8x1xf32>
    %47 = vector.broadcast %46 : vector<8x8x1xf32> to vector<8x8x8xf32>
    %48 = arith.divf %44, %47 : vector<8x8x8xf32>
    %cst_10 = arith.constant dense<0.000000e+00> : vector<8x8x8xf32>
    %49 = tpu.matmul %48, %38, %cst_10 {dimension_numbers = #tpu.dot_dimension_numbers<[2], [1], [1], [2], [0, 0, 0, 1, 1, 2], [0], [0]>} : vector<8x8x8xf32>, vector<8x8x8xf32>, vector<8x8x8xf32> -> vector<8x8x8xf32>
    %50 = vector.shape_cast %49 : vector<8x8x8xf32> to vector<4x16x8xf32>
    %c0_11 = arith.constant 0 : index
    %c0_12 = arith.constant 0 : index
    %c0_13 = arith.constant 0 : index
    %51 = vector.load %arg4[%c0_11, %c0_12, %c0_13] : memref<4x8x32xf32, #tpu.memory_space<vmem>>, vector<4x8x32xf32>
    %cst_14 = arith.constant dense<0.000000e+00> : vector<4x16x32xf32>
    %52 = tpu.matmul %50, %51, %cst_14 {dimension_numbers = #tpu.dot_dimension_numbers<[2], [1], [1], [2], [0, 0, 0, 1, 1, 2], [0], [0]>} : vector<4x16x8xf32>, vector<4x8x32xf32>, vector<4x16x32xf32> -> vector<4x16x32xf32>
    %c0_15 = arith.constant 0 : index
    %c0_16 = arith.constant 0 : index
    %53 = vector.load %arg5[%c0_15, %c0_16] : memref<1x32xf32, #tpu.memory_space<vmem>>, vector<1x32xf32>
    %54 = vector.extract_strided_slice %52 {offsets = [0, 0, 0], sizes = [1, 16, 32], strides = [1, 1, 1]} : vector<4x16x32xf32> to vector<1x16x32xf32>
    %55 = vector.shape_cast %54 : vector<1x16x32xf32> to vector<16x32xf32>
    %56 = vector.broadcast %53 : vector<1x32xf32> to vector<16x32xf32>
    %57 = arith.addf %56, %55 : vector<16x32xf32>
    %58 = vector.extract_strided_slice %52 {offsets = [1, 0, 0], sizes = [1, 16, 32], strides = [1, 1, 1]} : vector<4x16x32xf32> to vector<1x16x32xf32>
    %59 = vector.shape_cast %58 : vector<1x16x32xf32> to vector<16x32xf32>
    %60 = arith.addf %57, %59 : vector<16x32xf32>
    %61 = vector.extract_strided_slice %52 {offsets = [2, 0, 0], sizes = [1, 16, 32], strides = [1, 1, 1]} : vector<4x16x32xf32> to vector<1x16x32xf32>
    %62 = vector.shape_cast %61 : vector<1x16x32xf32> to vector<16x32xf32>
    %63 = arith.addf %60, %62 : vector<16x32xf32>
    %64 = vector.extract_strided_slice %52 {offsets = [3, 0, 0], sizes = [1, 16, 32], strides = [1, 1, 1]} : vector<4x16x32xf32> to vector<1x16x32xf32>
    %65 = vector.shape_cast %64 : vector<1x16x32xf32> to vector<16x32xf32>
    %66 = arith.addf %63, %65 : vector<16x32xf32>
    %67 = arith.addf %1, %66 : vector<16x32xf32>
    %c0_17 = arith.constant 0 : index
    %c0_18 = arith.constant 0 : index
    %68 = vector.load %arg6[%c0_17, %c0_18] : memref<1x32xf32, #tpu.memory_space<vmem>>, vector<1x32xf32>
    %c0_19 = arith.constant 0 : index
    %c0_20 = arith.constant 0 : index
    %69 = vector.load %arg7[%c0_19, %c0_20] : memref<1x32xf32, #tpu.memory_space<vmem>>, vector<1x32xf32>
    %cst_21 = arith.constant dense<0.000000e+00> : vector<16xf32>
    %70 = vector.multi_reduction <add>, %67, %cst_21 [1] : vector<16x32xf32> to vector<16xf32>
    %71 = vector.shape_cast %70 : vector<16xf32> to vector<16x1xf32>
    %cst_22 = arith.constant 3.200000e+01 : f32
    %72 = vector.broadcast %cst_22 : f32 to vector<16x1xf32>
    %73 = arith.divf %71, %72 : vector<16x1xf32>
    %74 = vector.broadcast %73 : vector<16x1xf32> to vector<16x32xf32>
    %75 = arith.subf %67, %74 : vector<16x32xf32>
    %76 = arith.mulf %75, %75 : vector<16x32xf32>
    %cst_23 = arith.constant dense<0.000000e+00> : vector<16xf32>
    %77 = vector.multi_reduction <add>, %76, %cst_23 [1] : vector<16x32xf32> to vector<16xf32>
    %78 = vector.shape_cast %77 : vector<16xf32> to vector<16x1xf32>
    %cst_24 = arith.constant 3.200000e+01 : f32
    %79 = vector.broadcast %cst_24 : f32 to vector<16x1xf32>
    %80 = arith.divf %78, %79 : vector<16x1xf32>
    %81 = vector.broadcast %73 : vector<16x1xf32> to vector<16x32xf32>
    %82 = arith.subf %67, %81 : vector<16x32xf32>
    %cst_25 = arith.constant 9.99999974E-6 : f32
    %83 = vector.broadcast %cst_25 : f32 to vector<16x1xf32>
    %84 = arith.addf %80, %83 : vector<16x1xf32>
    %85 = math.rsqrt %84 : vector<16x1xf32>
    %86 = vector.broadcast %85 : vector<16x1xf32> to vector<16x32xf32>
    %87 = arith.mulf %82, %86 : vector<16x32xf32>
    %88 = vector.broadcast %68 : vector<1x32xf32> to vector<16x32xf32>
    %89 = arith.mulf %87, %88 : vector<16x32xf32>
    %90 = vector.broadcast %69 : vector<1x32xf32> to vector<16x32xf32>
    %91 = arith.addf %89, %90 : vector<16x32xf32>
    %c0_26 = arith.constant 0 : index
    %c0_27 = arith.constant 0 : index
    %92 = vector.load %arg8[%c0_26, %c0_27] : memref<32x64xf32, #tpu.memory_space<vmem>>, vector<32x64xf32>
    %cst_28 = arith.constant dense<0.000000e+00> : vector<16x64xf32>
    %93 = tpu.matmul %91, %92, %cst_28 {dimension_numbers = #tpu.dot_dimension_numbers<[1], [0], [0], [1], [0, 0, 1, 1], [], []>} : vector<16x32xf32>, vector<32x64xf32>, vector<16x64xf32> -> vector<16x64xf32>
    %c0_29 = arith.constant 0 : index
    %c0_30 = arith.constant 0 : index
    %94 = vector.load %arg9[%c0_29, %c0_30] : memref<1x64xf32, #tpu.memory_space<vmem>>, vector<1x64xf32>
    %95 = vector.broadcast %94 : vector<1x64xf32> to vector<16x64xf32>
    %96 = arith.addf %93, %95 : vector<16x64xf32>
    %cst_31 = arith.constant 0.000000e+00 : f32
    %97 = vector.broadcast %cst_31 : f32 to vector<16x64xf32>
    %98 = arith.maximumf %96, %97 : vector<16x64xf32>
    %c0_32 = arith.constant 0 : index
    %c0_33 = arith.constant 0 : index
    %99 = vector.load %arg10[%c0_32, %c0_33] : memref<64x32xf32, #tpu.memory_space<vmem>>, vector<64x32xf32>
    %cst_34 = arith.constant dense<0.000000e+00> : vector<16x32xf32>
    %100 = tpu.matmul %98, %99, %cst_34 {dimension_numbers = #tpu.dot_dimension_numbers<[1], [0], [0], [1], [0, 0, 1, 1], [], []>} : vector<16x64xf32>, vector<64x32xf32>, vector<16x32xf32> -> vector<16x32xf32>
    %c0_35 = arith.constant 0 : index
    %c0_36 = arith.constant 0 : index
    %101 = vector.load %arg11[%c0_35, %c0_36] : memref<1x32xf32, #tpu.memory_space<vmem>>, vector<1x32xf32>
    %102 = vector.broadcast %101 : vector<1x32xf32> to vector<16x32xf32>
    %103 = arith.addf %100, %102 : vector<16x32xf32>
    %104 = arith.addf %91, %103 : vector<16x32xf32>
    %c0_37 = arith.constant 0 : index
    %c0_38 = arith.constant 0 : index
    %105 = vector.load %arg12[%c0_37, %c0_38] : memref<1x32xf32, #tpu.memory_space<vmem>>, vector<1x32xf32>
    %c0_39 = arith.constant 0 : index
    %c0_40 = arith.constant 0 : index
    %106 = vector.load %arg13[%c0_39, %c0_40] : memref<1x32xf32, #tpu.memory_space<vmem>>, vector<1x32xf32>
    %cst_41 = arith.constant dense<0.000000e+00> : vector<16xf32>
    %107 = vector.multi_reduction <add>, %104, %cst_41 [1] : vector<16x32xf32> to vector<16xf32>
    %108 = vector.shape_cast %107 : vector<16xf32> to vector<16x1xf32>
    %cst_42 = arith.constant 3.200000e+01 : f32
    %109 = vector.broadcast %cst_42 : f32 to vector<16x1xf32>
    %110 = arith.divf %108, %109 : vector<16x1xf32>
    %111 = vector.broadcast %110 : vector<16x1xf32> to vector<16x32xf32>
    %112 = arith.subf %104, %111 : vector<16x32xf32>
    %113 = arith.mulf %112, %112 : vector<16x32xf32>
    %cst_43 = arith.constant dense<0.000000e+00> : vector<16xf32>
    %114 = vector.multi_reduction <add>, %113, %cst_43 [1] : vector<16x32xf32> to vector<16xf32>
    %115 = vector.shape_cast %114 : vector<16xf32> to vector<16x1xf32>
    %cst_44 = arith.constant 3.200000e+01 : f32
    %116 = vector.broadcast %cst_44 : f32 to vector<16x1xf32>
    %117 = arith.divf %115, %116 : vector<16x1xf32>
    %118 = vector.broadcast %110 : vector<16x1xf32> to vector<16x32xf32>
    %119 = arith.subf %104, %118 : vector<16x32xf32>
    %cst_45 = arith.constant 9.99999974E-6 : f32
    %120 = vector.broadcast %cst_45 : f32 to vector<16x1xf32>
    %121 = arith.addf %117, %120 : vector<16x1xf32>
    %122 = math.rsqrt %121 : vector<16x1xf32>
    %123 = vector.broadcast %122 : vector<16x1xf32> to vector<16x32xf32>
    %124 = arith.mulf %119, %123 : vector<16x32xf32>
    %125 = vector.broadcast %105 : vector<1x32xf32> to vector<16x32xf32>
    %126 = arith.mulf %124, %125 : vector<16x32xf32>
    %127 = vector.broadcast %106 : vector<1x32xf32> to vector<16x32xf32>
    %128 = arith.addf %126, %127 : vector<16x32xf32>
    %129 = vector.shape_cast %128 : vector<16x32xf32> to vector<2x8x32xf32>
    %c0_46 = arith.constant 0 : index
    %c0_47 = arith.constant 0 : index
    %c0_48 = arith.constant 0 : index
    %130 = vector.load %arg14[%c0_46, %c0_47, %c0_48] : memref<2x8x32xf32, #tpu.memory_space<vmem>>, vector<2x8x32xf32>
    tpu.vector_store %arg14[%c0_46, %c0_47, %c0_48], %129 {strides = array<i32>} : memref<2x8x32xf32, #tpu.memory_space<vmem>>, vector<2x8x32xf32>,
    return
  }
  func.func @transform_0(%arg0: i32) -> (i32, i32, i32) {
    %c0_i32 = arith.constant 0 : i32
    %c0_i32_0 = arith.constant 0 : i32
    %c0_i32_1 = arith.constant 0 : i32
    return %arg0, %c0_i32, %c0_i32_0 : i32, i32, i32
  }
  func.func @transform_1(%arg0: i32) -> (i32, i32) {
    %c0_i32 = arith.constant 0 : i32
    %c0_i32_0 = arith.constant 0 : i32
    %c0_i32_1 = arith.constant 0 : i32
    return %c0_i32, %c0_i32_0 : i32, i32
  }
  func.func @transform_2(%arg0: i32) -> (i32, i32) {
    %c0_i32 = arith.constant 0 : i32
    %c0_i32_0 = arith.constant 0 : i32
    %c0_i32_1 = arith.constant 0 : i32
    return %c0_i32, %c0_i32_0 : i32, i32
  }
  func.func @transform_3(%arg0: i32) -> (i32, i32, i32) {
    %c0_i32 = arith.constant 0 : i32
    %c0_i32_0 = arith.constant 0 : i32
    %c0_i32_1 = arith.constant 0 : i32
    %c0_i32_2 = arith.constant 0 : i32
    return %c0_i32, %c0_i32_0, %c0_i32_1 : i32, i32, i32
  }
  func.func @transform_4(%arg0: i32) -> (i32, i32) {
    %c0_i32 = arith.constant 0 : i32
    %c0_i32_0 = arith.constant 0 : i32
    %c0_i32_1 = arith.constant 0 : i32
    return %c0_i32, %c0_i32_0 : i32, i32
  }
  func.func @transform_5(%arg0: i32) -> (i32, i32) {
    %c0_i32 = arith.constant 0 : i32
    %c0_i32_0 = arith.constant 0 : i32
    %c0_i32_1 = arith.constant 0 : i32
    return %c0_i32, %c0_i32_0 : i32, i32
  }
  func.func @transform_6(%arg0: i32) -> (i32, i32) {
    %c0_i32 = arith.constant 0 : i32
    %c0_i32_0 = arith.constant 0 : i32
    %c0_i32_1 = arith.constant 0 : i32
    return %c0_i32, %c0_i32_0 : i32, i32
  }
  func.func @transform_7(%arg0: i32) -> (i32, i32) {
    %c0_i32 = arith.constant 0 : i32
    %c0_i32_0 = arith.constant 0 : i32
    %c0_i32_1 = arith.constant 0 : i32
    return %c0_i32, %c0_i32_0 : i32, i32
  }
  func.func @transform_8(%arg0: i32) -> (i32, i32) {
    %c0_i32 = arith.constant 0 : i32
    %c0_i32_0 = arith.constant 0 : i32
    %c0_i32_1 = arith.constant 0 : i32
    return %c0_i32, %c0_i32_0 : i32, i32
  }
  func.func @transform_9(%arg0: i32) -> (i32, i32) {
    %c0_i32 = arith.constant 0 : i32
    %c0_i32_0 = arith.constant 0 : i32
    %c0_i32_1 = arith.constant 0 : i32
    return %c0_i32, %c0_i32_0 : i32, i32
  }
  func.func @transform_10(%arg0: i32) -> (i32, i32) {
    %c0_i32 = arith.constant 0 : i32
    %c0_i32_0 = arith.constant 0 : i32
    %c0_i32_1 = arith.constant 0 : i32
    return %c0_i32, %c0_i32_0 : i32, i32
  }
  func.func @transform_11(%arg0: i32) -> (i32, i32) {
    %c0_i32 = arith.constant 0 : i32
    %c0_i32_0 = arith.constant 0 : i32
    %c0_i32_1 = arith.constant 0 : i32
    return %c0_i32, %c0_i32_0 : i32, i32
  }
  func.func @transform_12(%arg0: i32) -> (i32, i32) {
    %c0_i32 = arith.constant 0 : i32
    %c0_i32_0 = arith.constant 0 : i32
    %c0_i32_1 = arith.constant 0 : i32
    return %c0_i32, %c0_i32_0 : i32, i32
  }
  func.func @transform_13(%arg0: i32) -> (i32, i32, i32) {
    %c0_i32 = arith.constant 0 : i32
    %c0_i32_0 = arith.constant 0 : i32
    %c0_i32_1 = arith.constant 0 : i32
    return %arg0, %c0_i32, %c0_i32_0 : i32, i32, i32
  }
}

</mosaic_0001>

<llo_original>
// kernel: tpu_custom_call.1
$region0: #{tpu_custom_call.1}
  #allocation0 [shape = 'u32[]', space=smem, size = 0x4, offset = 0x4, fixed_abs, tag = 'smem constant byte address 0x4 - core index']
  #allocation1 [shape = 'u32[72,128]{1,0:T(1,128)}', space=vmem, size = 0x9000, scoped, tag = 'internal scratch']
  %s0 = inlined_call_operand.hbm [shape: f32[2,8,32], index: 0, kind: input, shape index: {}]
  %s1 = inlined_call_operand.vmem [shape: f32[32,96], index: 1, kind: input, shape index: {}]
  %s2 = inlined_call_operand.vmem [shape: f32[1,96], index: 2, kind: input, shape index: {}]
  %s3 = inlined_call_operand.vmem [shape: f32[4,8,32], index: 3, kind: input, shape index: {}]
  %s4 = inlined_call_operand.vmem [shape: f32[1,32], index: 4, kind: input, shape index: {}]
  %s5 = inlined_call_operand.vmem [shape: f32[1,32], index: 5, kind: input, shape index: {}]
  %s6 = inlined_call_operand.vmem [shape: f32[1,32], index: 6, kind: input, shape index: {}]
  %s7 = inlined_call_operand.vmem [shape: f32[32,64], index: 7, kind: input, shape index: {}]
  %s8 = inlined_call_operand.vmem [shape: f32[1,64], index: 8, kind: input, shape index: {}]
  %s9 = inlined_call_operand.vmem [shape: f32[64,32], index: 9, kind: input, shape index: {}]
  %s10 = inlined_call_operand.vmem [shape: f32[1,32], index: 10, kind: input, shape index: {}]
  %s11 = inlined_call_operand.vmem [shape: f32[1,32], index: 11, kind: input, shape index: {}]
  %s12 = inlined_call_operand.vmem [shape: f32[1,32], index: 12, kind: input, shape index: {}]
  %s13 = inlined_call_operand.hbm [shape: f32[2,8,32], index: 13, kind: output, shape index: {}]
  %s14 = sld [smem:[#allocation0]]
  $region66: #{tpu_custom_call.1} parent=0
    _
  %s16 = ssub.s32 1, %s14
  %s17 = scalar_select 0, %s16, %s14
  $region1: #{tpu_custom_call.1} parent=0
    #allocation2 [shape = 'u8[8192]{0}', space=vmem, size = 0x2000, scoped, tag = 'input window, operand 0, single buffered']
    #allocation3 [shape = 's32[1]{0}', space=sflag, size = 0x4, scoped, tag = 'scoped memory for tpu_custom_call.1']
    #allocation4 [shape = 's32[1]{0}', space=sflag, size = 0x4, scoped, tag = 'scoped memory for tpu_custom_call.1']
    #allocation5 [shape = 'u8[8192]{0}', space=vmem, size = 0x2000, scoped, tag = 'output window, operand 0, single buffered']
    %18 = vsyncpa [#allocation3], 0
    %19 = vsyncpa [#allocation4], 0
    // Predicated region
    $region2: #{tpu_custom_call.1} parent=1 // pred_check
      _
    $region3: #{tpu_custom_call.1} parent=1 // pred_check_branch
      %21 = sbr.rel (0) target = $region5
    $region4: #{tpu_custom_call.1} parent=1 // pred_region
      %23 = vsyncadd [#allocation3], 0
      %s24 = sshll.u32 %s0, 4
      %s25 = int_to_ptr.hbm [resolvable:$true] %s24
      %s26 = sshll.u32 [#allocation2], 4
      %s27 = int_to_ptr.vmem [resolvable:$true] %s26
      %32 = dma.hbm_to_vmem [thread:$0]  %s25, 256, %s27, [#allocation3], 128, 128, 8
    $region5: #{tpu_custom_call.1} parent=1 // pred_fallthru
      _
    // Predicated region
    $region6: #{tpu_custom_call.1} parent=1 // pred_check
      _
    $region7: #{tpu_custom_call.1} parent=1 // pred_check_branch
      %34 = sbr.rel (0) target = $region9
    $region8: #{tpu_custom_call.1} parent=1 // pred_region
      _
    $region9: #{tpu_custom_call.1} parent=1 // pred_fallthru
      _
    // Predicated region
    $region10: #{tpu_custom_call.1} parent=1 // pred_check
      _
    $region11: #{tpu_custom_call.1} parent=1 // pred_check_branch
      %36 = sbr.rel (0) target = $region13
    $region12: #{tpu_custom_call.1} parent=1 // pred_region
      _
    $region13: #{tpu_custom_call.1} parent=1 // pred_fallthru
      _
    // Predicated region
    $region14: #{tpu_custom_call.1} parent=1 // pred_check
      _
    $region15: #{tpu_custom_call.1} parent=1 // pred_check_branch
      %38 = sbr.rel (0) target = $region17
    $region16: #{tpu_custom_call.1} parent=1 // pred_region
      _
    $region17: #{tpu_custom_call.1} parent=1 // pred_fallthru
      _
    // Predicated region
    $region18: #{tpu_custom_call.1} parent=1 // pred_check
      _
    $region19: #{tpu_custom_call.1} parent=1 // pred_check_branch
      %40 = sbr.rel (0) target = $region21
    $region20: #{tpu_custom_call.1} parent=1 // pred_region
      _
    $region21: #{tpu_custom_call.1} parent=1 // pred_fallthru
      _
    // Predicated region
    $region22: #{tpu_custom_call.1} parent=1 // pred_check
      _
    $region23: #{tpu_custom_call.1} parent=1 // pred_check_branch
      %42 = sbr.rel (0) target = $region25
    $region24: #{tpu_custom_call.1} parent=1 // pred_region
      _
    $region25: #{tpu_custom_call.1} parent=1 // pred_fallthru
      _
    // Predicated region
    $region26: #{tpu_custom_call.1} parent=1 // pred_check
      _
    $region27: #{tpu_custom_call.1} parent=1 // pred_check_branch
      %44 = sbr.rel (0) target = $region29
    $region28: #{tpu_custom_call.1} parent=1 // pred_region
      _
    $region29: #{tpu_custom_call.1} parent=1 // pred_fallthru
      _
    // Predicated region
    $region30: #{tpu_custom_call.1} parent=1 // pred_check
      _
    $region31: #{tpu_custom_call.1} parent=1 // pred_check_branch
      %46 = sbr.rel (0) target = $region33
    $region32: #{tpu_custom_call.1} parent=1 // pred_region
      _
    $region33: #{tpu_custom_call.1} parent=1 // pred_fallthru
      _
    // Predicated region
    $region34: #{tpu_custom_call.1} parent=1 // pred_check
      _
    $region35: #{tpu_custom_call.1} parent=1 // pred_check_branch
      %48 = sbr.rel (0) target = $region37
    $region36: #{tpu_custom_call.1} parent=1 // pred_region
      _
    $region37: #{tpu_custom_call.1} parent=1 // pred_fallthru
      _
    // Predicated region
    $region38: #{tpu_custom_call.1} parent=1 // pred_check
      _
    $region39: #{tpu_custom_call.1} parent=1 // pred_check_branch
      %50 = sbr.rel (0) target = $region41
    $region40: #{tpu_custom_call.1} parent=1 // pred_region
      _
    $region41: #{tpu_custom_call.1} parent=1 // pred_fallthru
      _
    // Predicated region
    $region42: #{tpu_custom_call.1} parent=1 // pred_check
      _
    $region43: #{tpu_custom_call.1} parent=1 // pred_check_branch
      %52 = sbr.rel (0) target = $region45
    $region44: #{tpu_custom_call.1} parent=1 // pred_region
      _
    $region45: #{tpu_custom_call.1} parent=1 // pred_fallthru
      _
    // Predicated region
    $region46: #{tpu_custom_call.1} parent=1 // pred_check
      _
    $region47: #{tpu_custom_call.1} parent=1 // pred_check_branch
      %54 = sbr.rel (0) target = $region49
    $region48: #{tpu_custom_call.1} parent=1 // pred_region
      _
    $region49: #{tpu_custom_call.1} parent=1 // pred_fallthru
      _
    // Predicated region
    $region50: #{tpu_custom_call.1} parent=1 // pred_check
      _
    $region51: #{tpu_custom_call.1} parent=1 // pred_check_branch
      %56 = sbr.rel (0) target = $region53
    $region52: #{tpu_custom_call.1} parent=1 // pred_region
      _
    $region53: #{tpu_custom_call.1} parent=1 // pred_fallthru
      _
    // Predicated region
    $region54: #{tpu_custom_call.1} parent=1 // pred_check
      _
    $region55: #{tpu_custom_call.1} parent=1 // pred_check_branch
      %58 = sbr.rel (0) target = $region57
    $region56: #{tpu_custom_call.1} parent=1 // pred_region
      %60 = dma.done [#allocation3], 256
    $region57: #{tpu_custom_call.1} parent=1 // pred_fallthru
      _
    %v61 = vld [vmem:[#allocation2] sm:$0xff]
    %v62 = vld [vmem:[#allocation2 + $0x8] sm:$0xff]
    %v63 = vld [vmem:[%s1] sm:$0xff]
    %v64 = vld [vmem:[%s1 + $0x8] sm:$0xff]
    %v65 = vld [vmem:[%s1 + $0x10] sm:$0xff]
    %v66 = vld [vmem:[%s1 + $0x18] sm:$0xff]
    %v67 = vld [vmem:[%s2] sm:$0x1]
    %v69 = vperm.slane %v67, 0
    %vm71 = vcmask 261120
    %v73 = vsel %vm71, %v61, 0
    %v76 = vsel %vm71, %v62, 0
    %78 = vmatpush.msra.mxu0 0.0
    %79 = vmatpush.msra.mxu0 0.0
    %80 = vmatpush.msra.mxu0 0.0
    %81 = vmatpush.msra.mxu0 0.0
    %82 = vmatpush.msra.mxu0 0.0
    %83 = vmatpush.msra.mxu0 0.0
    %84 = vmatpush.msra.mxu0 0.0
    %85 = vmatpush.msra.mxu0 0.0
    %86 = vmatpush.msra.mxu0 0.0
    %87 = vmatpush.msra.mxu0 0.0
    %88 = vmatpush.msra.mxu0 0.0
    %89 = vmatpush.msra.mxu0 0.0
    %90 = vmatpush.msra.mxu0 %v66
    %91 = vmatpush.msra.mxu0 %v65
    %92 = vmatpush.msra.mxu0 %v64
    %93 = vmatpush.msra.mxu0 %v63
    %94 = vmatmul.f32.gmra.mxu0 %v73
    %v95 = vpop.f32.mrf.mxu0
    %v96 = vadd.f32 %v69, %v95
    %97 = vmatmul.f32.gmra.mxu0 %v76
    %v98 = vpop.f32.mrf.mxu0
    %v99 = vadd.f32 %v69, %v98
    %100 = vdwg.mxu0
    %v101 = vmul.f32 %v96, 0.35355338
    %v102 = vmul.f32 %v99, 0.35355338
    %105 = vrot.lane.b32.xlu0 %v101, 120
    %v106 = vpop.permute.xlu0 %105
    %107 = vrot.lane.b32.xlu0 %v102, 120
    %v108 = vpop.permute.xlu0 %107
    %109 = vrot.lane.b32.xlu0 %v101, 112
    %v110 = vpop.permute.xlu0 %109
    %111 = vrot.lane.b32.xlu0 %v102, 112
    %v112 = vpop.permute.xlu0 %111
    %113 = vrot.lane.b32.xlu0 %v101, 104
    %v114 = vpop.permute.xlu0 %113
    %115 = vrot.lane.b32.xlu0 %v102, 104
    %v116 = vpop.permute.xlu0 %115
    %119 = vrot.lane.b32.xlu0 %v96, 120
    %v120 = vpop.permute.xlu0 %119
    %121 = vrot.lane.b32.xlu0 %v99, 120
    %v122 = vpop.permute.xlu0 %121
    %123 = vrot.lane.b32.xlu0 %v96, 112
    %v124 = vpop.permute.xlu0 %123
    %125 = vrot.lane.b32.xlu0 %v99, 112
    %v126 = vpop.permute.xlu0 %125
    %127 = vrot.lane.b32.xlu0 %v96, 104
    %v128 = vpop.permute.xlu0 %127
    %129 = vrot.lane.b32.xlu0 %v99, 104
    %v130 = vpop.permute.xlu0 %129
    %131 = vrot.lane.b32.xlu0 %v96, 96
    %v132 = vpop.permute.xlu0 %131
    %vm133 = vcmask 64512
    %v134 = vsel %vm133, %v101, 0
    %v136 = vsel %vm133, %v132, 0
    %138 = vmatpush.xpose.msra.mxu0 0.0
    %139 = vmatpush.xpose.msra.mxu0 0.0
    %140 = vmatpush.xpose.msra.mxu0 0.0
    %141 = vmatpush.xpose.msra.mxu0 0.0
    %142 = vmatpush.xpose.msra.mxu0 0.0
    %143 = vmatpush.xpose.msra.mxu0 0.0
    %144 = vmatpush.xpose.msra.mxu0 0.0
    %145 = vmatpush.xpose.msra.mxu0 0.0
    %146 = vmatpush.xpose.msra.mxu0 0.0
    %147 = vmatpush.xpose.msra.mxu0 0.0
    %148 = vmatpush.xpose.msra.mxu0 0.0
    %149 = vmatpush.xpose.msra.mxu0 0.0
    %150 = vmatpush.xpose.msra.mxu0 0.0
    %151 = vmatpush.xpose.msra.mxu0 0.0
    %152 = vmatpush.xpose.msra.mxu0 0.0
    %153 = vmatpush.xpose.msra.mxu0 %v136
    %154 = vmatmul.f32.gmra.mxu0 %v134
    %v155 = vpop.f32.mrf.mxu0
    %v156 = vadd.f32 0.0, %v155
    %157 = vdwg.mxu0
    %158 = vrot.lane.b32.xlu0 %v99, 96
    %v159 = vpop.permute.xlu0 %158
    %v160 = vsel %vm133, %v102, 0
    %v162 = vsel %vm133, %v159, 0
    %164 = vmatpush.xpose.msra.mxu0 0.0
    %165 = vmatpush.xpose.msra.mxu0 0.0
    %166 = vmatpush.xpose.msra.mxu0 0.0
    %167 = vmatpush.xpose.msra.mxu0 0.0
    %168 = vmatpush.xpose.msra.mxu0 0.0
    %169 = vmatpush.xpose.msra.mxu0 0.0
    %170 = vmatpush.xpose.msra.mxu0 0.0
    %171 = vmatpush.xpose.msra.mxu0 0.0
    %172 = vmatpush.xpose.msra.mxu0 0.0
    %173 = vmatpush.xpose.msra.mxu0 0.0
    %174 = vmatpush.xpose.msra.mxu0 0.0
    %175 = vmatpush.xpose.msra.mxu0 0.0
    %176 = vmatpush.xpose.msra.mxu0 0.0
    %177 = vmatpush.xpose.msra.mxu0 0.0
    %178 = vmatpush.xpose.msra.mxu0 0.0
    %179 = vmatpush.xpose.msra.mxu0 %v162
    %180 = vmatmul.f32.gmra.mxu0 %v160
    %v181 = vpop.f32.mrf.mxu0
    %v182 = vadd.f32 0.0, %v181
    %183 = vdwg.mxu0
    %184 = vrot.lane.b32.xlu0 %v120, 96
    %v185 = vpop.permute.xlu0 %184
    %v186 = vsel %vm133, %v106, 0
    %v188 = vsel %vm133, %v185, 0
    %190 = vmatpush.xpose.msra.mxu0 0.0
    %191 = vmatpush.xpose.msra.mxu0 0.0
    %192 = vmatpush.xpose.msra.mxu0 0.0
    %193 = vmatpush.xpose.msra.mxu0 0.0
    %194 = vmatpush.xpose.msra.mxu0 0.0
    %195 = vmatpush.xpose.msra.mxu0 0.0
    %196 = vmatpush.xpose.msra.mxu0 0.0
    %197 = vmatpush.xpose.msra.mxu0 0.0
    %198 = vmatpush.xpose.msra.mxu0 0.0
    %199 = vmatpush.xpose.msra.mxu0 0.0
    %200 = vmatpush.xpose.msra.mxu0 0.0
    %201 = vmatpush.xpose.msra.mxu0 0.0
    %202 = vmatpush.xpose.msra.mxu0 0.0
    %203 = vmatpush.xpose.msra.mxu0 0.0
    %204 = vmatpush.xpose.msra.mxu0 0.0
    %205 = vmatpush.xpose.msra.mxu0 %v188
    %206 = vmatmul.f32.gmra.mxu0 %v186
    %v207 = vpop.f32.mrf.mxu0
    %v208 = vadd.f32 0.0, %v207
    %209 = vdwg.mxu0
    %210 = vrot.lane.b32.xlu0 %v122, 96
    %v211 = vpop.permute.xlu0 %210
    %v212 = vsel %vm133, %v108, 0
    %v214 = vsel %vm133, %v211, 0
    %216 = vmatpush.xpose.msra.mxu0 0.0
    %217 = vmatpush.xpose.msra.mxu0 0.0
    %218 = vmatpush.xpose.msra.mxu0 0.0
    %219 = vmatpush.xpose.msra.mxu0 0.0
    %220 = vmatpush.xpose.msra.mxu0 0.0
    %221 = vmatpush.xpose.msra.mxu0 0.0
    %222 = vmatpush.xpose.msra.mxu0 0.0
    %223 = vmatpush.xpose.msra.mxu0 0.0
    %224 = vmatpush.xpose.msra.mxu0 0.0
    %225 = vmatpush.xpose.msra.mxu0 0.0
    %226 = vmatpush.xpose.msra.mxu0 0.0
    %227 = vmatpush.xpose.msra.mxu0 0.0
    %228 = vmatpush.xpose.msra.mxu0 0.0
    %229 = vmatpush.xpose.msra.mxu0 0.0
    %230 = vmatpush.xpose.msra.mxu0 0.0
    %231 = vmatpush.xpose.msra.mxu0 %v214
    %232 = vmatmul.f32.gmra.mxu0 %v212
    %v233 = vpop.f32.mrf.mxu0
    %v234 = vadd.f32 0.0, %v233
    %235 = vdwg.mxu0
    %236 = vrot.lane.b32.xlu0 %v124, 96
    %v237 = vpop.permute.xlu0 %236
    %v238 = vsel %vm133, %v110, 0
    %v240 = vsel %vm133, %v237, 0
    %242 = vmatpush.xpose.msra.mxu0 0.0
    %243 = vmatpush.xpose.msra.mxu0 0.0
    %244 = vmatpush.xpose.msra.mxu0 0.0
    %245 = vmatpush.xpose.msra.mxu0 0.0
    %246 = vmatpush.xpose.msra.mxu0 0.0
    %247 = vmatpush.xpose.msra.mxu0 0.0
    %248 = vmatpush.xpose.msra.mxu0 0.0
    %249 = vmatpush.xpose.msra.mxu0 0.0
    %250 = vmatpush.xpose.msra.mxu0 0.0
    %251 = vmatpush.xpose.msra.mxu0 0.0
    %252 = vmatpush.xpose.msra.mxu0 0.0
    %253 = vmatpush.xpose.msra.mxu0 0.0
    %254 = vmatpush.xpose.msra.mxu0 0.0
    %255 = vmatpush.xpose.msra.mxu0 0.0
    %256 = vmatpush.xpose.msra.mxu0 0.0
    %257 = vmatpush.xpose.msra.mxu0 %v240
    %258 = vmatmul.f32.gmra.mxu0 %v238
    %v259 = vpop.f32.mrf.mxu0
    %v260 = vadd.f32 0.0, %v259
    %261 = vdwg.mxu0
    %262 = vrot.lane.b32.xlu0 %v126, 96
    %v263 = vpop.permute.xlu0 %262
    %v264 = vsel %vm133, %v112, 0
    %v266 = vsel %vm133, %v263, 0
    %268 = vmatpush.xpose.msra.mxu0 0.0
    %269 = vmatpush.xpose.msra.mxu0 0.0
    %270 = vmatpush.xpose.msra.mxu0 0.0
    %271 = vmatpush.xpose.msra.mxu0 0.0
    %272 = vmatpush.xpose.msra.mxu0 0.0
    %273 = vmatpush.xpose.msra.mxu0 0.0
    %274 = vmatpush.xpose.msra.mxu0 0.0
    %275 = vmatpush.xpose.msra.mxu0 0.0
    %276 = vmatpush.xpose.msra.mxu0 0.0
    %277 = vmatpush.xpose.msra.mxu0 0.0
    %278 = vmatpush.xpose.msra.mxu0 0.0
    %279 = vmatpush.xpose.msra.mxu0 0.0
    %280 = vmatpush.xpose.msra.mxu0 0.0
    %281 = vmatpush.xpose.msra.mxu0 0.0
    %282 = vmatpush.xpose.msra.mxu0 0.0
    %283 = vmatpush.xpose.msra.mxu0 %v266
    %284 = vmatmul.f32.gmra.mxu0 %v264
    %v285 = vpop.f32.mrf.mxu0
    %v286 = vadd.f32 0.0, %v285
    %287 = vdwg.mxu0
    %288 = vrot.lane.b32.xlu0 %v128, 96
    %v289 = vpop.permute.xlu0 %288
    %v290 = vsel %vm133, %v114, 0
    %v292 = vsel %vm133, %v289, 0
    %294 = vmatpush.xpose.msra.mxu0 0.0
    %295 = vmatpush.xpose.msra.mxu0 0.0
    %296 = vmatpush.xpose.msra.mxu0 0.0
    %297 = vmatpush.xpose.msra.mxu0 0.0
    %298 = vmatpush.xpose.msra.mxu0 0.0
    %299 = vmatpush.xpose.msra.mxu0 0.0
    %300 = vmatpush.xpose.msra.mxu0 0.0
    %301 = vmatpush.xpose.msra.mxu0 0.0
    %302 = vmatpush.xpose.msra.mxu0 0.0
    %303 = vmatpush.xpose.msra.mxu0 0.0
    %304 = vmatpush.xpose.msra.mxu0 0.0
    %305 = vmatpush.xpose.msra.mxu0 0.0
    %306 = vmatpush.xpose.msra.mxu0 0.0
    %307 = vmatpush.xpose.msra.mxu0 0.0
    %308 = vmatpush.xpose.msra.mxu0 0.0
    %309 = vmatpush.xpose.msra.mxu0 %v292
    %310 = vmatmul.f32.gmra.mxu0 %v290
    %v311 = vpop.f32.mrf.mxu0
    %v312 = vadd.f32 0.0, %v311
    %313 = vdwg.mxu0
    %314 = vrot.lane.b32.xlu0 %v130, 96
    %v315 = vpop.permute.xlu0 %314
    %v316 = vsel %vm133, %v116, 0
    %v318 = vsel %vm133, %v315, 0
    %320 = vmatpush.xpose.msra.mxu0 0.0
    %321 = vmatpush.xpose.msra.mxu0 0.0
    %322 = vmatpush.xpose.msra.mxu0 0.0
    %323 = vmatpush.xpose.msra.mxu0 0.0
    %324 = vmatpush.xpose.msra.mxu0 0.0
    %325 = vmatpush.xpose.msra.mxu0 0.0
    %326 = vmatpush.xpose.msra.mxu0 0.0
    %327 = vmatpush.xpose.msra.mxu0 0.0
    %328 = vmatpush.xpose.msra.mxu0 0.0
    %329 = vmatpush.xpose.msra.mxu0 0.0
    %330 = vmatpush.xpose.msra.mxu0 0.0
    %331 = vmatpush.xpose.msra.mxu0 0.0
    %332 = vmatpush.xpose.msra.mxu0 0.0
    %333 = vmatpush.xpose.msra.mxu0 0.0
    %334 = vmatpush.xpose.msra.mxu0 0.0
    %335 = vmatpush.xpose.msra.mxu0 %v318
    %336 = vmatmul.f32.gmra.mxu0 %v316
    %v337 = vpop.f32.mrf.mxu0
    %v338 = vadd.f32 0.0, %v337
    %339 = vdwg.mxu0
    %v340 = vsel %vm133, %v156, -inf
    %341 = vmax.xlane.f32.xlu0 %v340
    %v342 = vpop.xlane.xlu0 %341
    %v343 = vsel %vm133, %v182, -inf
    %344 = vmax.xlane.f32.xlu0 %v343
    %v345 = vpop.xlane.xlu0 %344
    %v346 = vsel %vm133, %v208, -inf
    %347 = vmax.xlane.f32.xlu0 %v346
    %v348 = vpop.xlane.xlu0 %347
    %v349 = vsel %vm133, %v234, -inf
    %350 = vmax.xlane.f32.xlu0 %v349
    %v351 = vpop.xlane.xlu0 %350
    %v352 = vsel %vm133, %v260, -inf
    %353 = vmax.xlane.f32.xlu0 %v352
    %v354 = vpop.xlane.xlu0 %353
    %v355 = vsel %vm133, %v286, -inf
    %356 = vmax.xlane.f32.xlu0 %v355
    %v357 = vpop.xlane.xlu0 %356
    %v358 = vsel %vm133, %v312, -inf
    %359 = vmax.xlane.f32.xlu0 %v358
    %v360 = vpop.xlane.xlu0 %359
    %v361 = vsel %vm133, %v338, -inf
    %362 = vmax.xlane.f32.xlu0 %v361
    %v363 = vpop.xlane.xlu0 %362
    %v364 = vsub.f32 %v156, %v342
    %v365 = vsub.f32 %v182, %v345
    %v366 = vsub.f32 %v208, %v348
    %v367 = vsub.f32 %v234, %v351
    %v368 = vsub.f32 %v260, %v354
    %v369 = vsub.f32 %v286, %v357
    %v370 = vsub.f32 %v312, %v360
    %v371 = vsub.f32 %v338, %v363
    %v372 = vmul.f32 %v364, 1.442695
    %v373 = vpow.pop %v372
    %v374 = vmul.f32 %v365, 1.442695
    %v375 = vpow.pop %v374
    %v376 = vmul.f32 %v366, 1.442695
    %v377 = vpow.pop %v376
    %v378 = vmul.f32 %v367, 1.442695
    %v379 = vpow.pop %v378
    %v380 = vmul.f32 %v368, 1.442695
    %v381 = vpow.pop %v380
    %v382 = vmul.f32 %v369, 1.442695
    %v383 = vpow.pop %v382
    %v384 = vmul.f32 %v370, 1.442695
    %v385 = vpow.pop %v384
    %v386 = vmul.f32 %v371, 1.442695
    %v387 = vpow.pop %v386
    %v388 = vsel %vm133, %v373, 0.0
    %389 = vadd.xlane.f32.xlu0 %v388
    %v390 = vpop.xlane.xlu0 %389
    %v391 = vsel %vm133, %v375, 0.0
    %392 = vadd.xlane.f32.xlu0 %v391
    %v393 = vpop.xlane.xlu0 %392
    %v394 = vsel %vm133, %v377, 0.0
    %395 = vadd.xlane.f32.xlu0 %v394
    %v396 = vpop.xlane.xlu0 %395
    %v397 = vsel %vm133, %v379, 0.0
    %398 = vadd.xlane.f32.xlu0 %v397
    %v399 = vpop.xlane.xlu0 %398
    %v400 = vsel %vm133, %v381, 0.0
    %401 = vadd.xlane.f32.xlu0 %v400
    %v402 = vpop.xlane.xlu0 %401
    %v403 = vsel %vm133, %v383, 0.0
    %404 = vadd.xlane.f32.xlu0 %v403
    %v405 = vpop.xlane.xlu0 %404
    %v406 = vsel %vm133, %v385, 0.0
    %407 = vadd.xlane.f32.xlu0 %v406
    %v408 = vpop.xlane.xlu0 %407
    %v409 = vsel %vm133, %v387, 0.0
    %410 = vadd.xlane.f32.xlu0 %v409
    %v411 = vpop.xlane.xlu0 %410
    %v412 = vrcp.pop %v390
    %v413 = vmul.f32 %v390, %v412
    %v414 = vsub.f32 1.0, %v413
    %v415 = vmul.f32 %v412, %v414
    %v416 = vadd.f32 %v412, %v415
    %vm417 = vweird.f32 %v390
    %vm418 = vweird.f32 %v412
    %vm419 = vmor %vm417, %vm418
    %v420 = vsel %vm419, %v412, %v416
    %v421 = vand.u32 2147483647, %v390
    %vm422 = vcmp.eq.f32.partialorder %v421, 8.507059e+37
    %v423 = vand.u32 %v390, 2147483648
    %v424 = vor.u32 1.1754944e-38, %v423
    %v425 = vsel %vm422, %v424, %v420
    %v426 = vmul.f32 %v373, %v425
    %v427 = vrcp.pop %v393
    %v428 = vmul.f32 %v393, %v427
    %v429 = vsub.f32 1.0, %v428
    %v430 = vmul.f32 %v427, %v429
    %v431 = vadd.f32 %v427, %v430
    %vm432 = vweird.f32 %v393
    %vm433 = vweird.f32 %v427
    %vm434 = vmor %vm432, %vm433
    %v435 = vsel %vm434, %v427, %v431
    %v436 = vand.u32 2147483647, %v393
    %vm437 = vcmp.eq.f32.partialorder %v436, 8.507059e+37
    %v438 = vand.u32 %v393, 2147483648
    %v439 = vor.u32 1.1754944e-38, %v438
    %v440 = vsel %vm437, %v439, %v435
    %v441 = vmul.f32 %v375, %v440
    %v442 = vrcp.pop %v396
    %v443 = vmul.f32 %v396, %v442
    %v444 = vsub.f32 1.0, %v443
    %v445 = vmul.f32 %v442, %v444
    %v446 = vadd.f32 %v442, %v445
    %vm447 = vweird.f32 %v396
    %vm448 = vweird.f32 %v442
    %vm449 = vmor %vm447, %vm448
    %v450 = vsel %vm449, %v442, %v446
    %v451 = vand.u32 2147483647, %v396
    %vm452 = vcmp.eq.f32.partialorder %v451, 8.507059e+37
    %v453 = vand.u32 %v396, 2147483648
    %v454 = vor.u32 1.1754944e-38, %v453
    %v455 = vsel %vm452, %v454, %v450
    %v456 = vmul.f32 %v377, %v455
    %v457 = vrcp.pop %v399
    %v458 = vmul.f32 %v399, %v457
    %v459 = vsub.f32 1.0, %v458
    %v460 = vmul.f32 %v457, %v459
    %v461 = vadd.f32 %v457, %v460
    %vm462 = vweird.f32 %v399
    %vm463 = vweird.f32 %v457
    %vm464 = vmor %vm462, %vm463
    %v465 = vsel %vm464, %v457, %v461
    %v466 = vand.u32 2147483647, %v399
    %vm467 = vcmp.eq.f32.partialorder %v466, 8.507059e+37
    %v468 = vand.u32 %v399, 2147483648
    %v469 = vor.u32 1.1754944e-38, %v468
    %v470 = vsel %vm467, %v469, %v465
    %v471 = vmul.f32 %v379, %v470
    %v472 = vrcp.pop %v402
    %v473 = vmul.f32 %v402, %v472
    %v474 = vsub.f32 1.0, %v473
    %v475 = vmul.f32 %v472, %v474
    %v476 = vadd.f32 %v472, %v475
    %vm477 = vweird.f32 %v402
    %vm478 = vweird.f32 %v472
    %vm479 = vmor %vm477, %vm478
    %v480 = vsel %vm479, %v472, %v476
    %v481 = vand.u32 2147483647, %v402
    %vm482 = vcmp.eq.f32.partialorder %v481, 8.507059e+37
    %v483 = vand.u32 %v402, 2147483648
    %v484 = vor.u32 1.1754944e-38, %v483
    %v485 = vsel %vm482, %v484, %v480
    %v486 = vmul.f32 %v381, %v485
    %v487 = vrcp.pop %v405
    %v488 = vmul.f32 %v405, %v487
    %v489 = vsub.f32 1.0, %v488
    %v490 = vmul.f32 %v487, %v489
    %v491 = vadd.f32 %v487, %v490
    %vm492 = vweird.f32 %v405
    %vm493 = vweird.f32 %v487
    %vm494 = vmor %vm492, %vm493
    %v495 = vsel %vm494, %v487, %v491
    %v496 = vand.u32 2147483647, %v405
    %vm497 = vcmp.eq.f32.partialorder %v496, 8.507059e+37
    %v498 = vand.u32 %v405, 2147483648
    %v499 = vor.u32 1.1754944e-38, %v498
    %v500 = vsel %vm497, %v499, %v495
    %v501 = vmul.f32 %v383, %v500
    %v502 = vrcp.pop %v408
    %v503 = vmul.f32 %v408, %v502
    %v504 = vsub.f32 1.0, %v503
    %v505 = vmul.f32 %v502, %v504
    %v506 = vadd.f32 %v502, %v505
    %vm507 = vweird.f32 %v408
    %vm508 = vweird.f32 %v502
    %vm509 = vmor %vm507, %vm508
    %v510 = vsel %vm509, %v502, %v506
    %v511 = vand.u32 2147483647, %v408
    %vm512 = vcmp.eq.f32.partialorder %v511, 8.507059e+37
    %v513 = vand.u32 %v408, 2147483648
    %v514 = vor.u32 1.1754944e-38, %v513
    %v515 = vsel %vm512, %v514, %v510
    %v516 = vmul.f32 %v385, %v515
    %v517 = vrcp.pop %v411
    %v518 = vmul.f32 %v411, %v517
    %v519 = vsub.f32 1.0, %v518
    %v520 = vmul.f32 %v517, %v519
    %v521 = vadd.f32 %v517, %v520
    %vm522 = vweird.f32 %v411
    %vm523 = vweird.f32 %v517
    %vm524 = vmor %vm522, %vm523
    %v525 = vsel %vm524, %v517, %v521
    %v526 = vand.u32 2147483647, %v411
    %vm527 = vcmp.eq.f32.partialorder %v526, 8.507059e+37
    %v528 = vand.u32 %v411, 2147483648
    %v529 = vor.u32 1.1754944e-38, %v528
    %v530 = vsel %vm527, %v529, %v525
    %v531 = vmul.f32 %v387, %v530
    %532 = vrot.lane.b32.xlu0 %v96, 64
    %v533 = vpop.permute.xlu0 %532
    %v536 = vsel %vm133, %v426, 0
    %538 = vmatpush.msra.mxu0 0.0
    %539 = vmatpush.msra.mxu0 0.0
    %540 = vmatpush.msra.mxu0 0.0
    %541 = vmatpush.msra.mxu0 0.0
    %542 = vmatpush.msra.mxu0 0.0
    %543 = vmatpush.msra.mxu0 0.0
    %544 = vmatpush.msra.mxu0 0.0
    %545 = vmatpush.msra.mxu0 0.0
    %546 = vmatpush.msra.mxu0 0.0
    %547 = vmatpush.msra.mxu0 0.0
    %548 = vmatpush.msra.mxu0 0.0
    %549 = vmatpush.msra.mxu0 0.0
    %550 = vmatpush.msra.mxu0 0.0
    %551 = vmatpush.msra.mxu0 0.0
    %552 = vmatpush.msra.mxu0 0.0
    %553 = vmatpush.msra.mxu0 %v533
    %554 = vmatmul.f32.gmra.mxu0 %v536
    %v555 = vpop.f32.mrf.mxu0
    %v556 = vadd.f32 0.0, %v555
    %557 = vdwg.mxu0
    %558 = vrot.lane.b32.xlu0 %v99, 64
    %v559 = vpop.permute.xlu0 %558
    %v562 = vsel %vm133, %v441, 0
    %564 = vmatpush.msra.mxu0 0.0
    %565 = vmatpush.msra.mxu0 0.0
    %566 = vmatpush.msra.mxu0 0.0
    %567 = vmatpush.msra.mxu0 0.0
    %568 = vmatpush.msra.mxu0 0.0
    %569 = vmatpush.msra.mxu0 0.0
    %570 = vmatpush.msra.mxu0 0.0
    %571 = vmatpush.msra.mxu0 0.0
    %572 = vmatpush.msra.mxu0 0.0
    %573 = vmatpush.msra.mxu0 0.0
    %574 = vmatpush.msra.mxu0 0.0
    %575 = vmatpush.msra.mxu0 0.0
    %576 = vmatpush.msra.mxu0 0.0
    %577 = vmatpush.msra.mxu0 0.0
    %578 = vmatpush.msra.mxu0 0.0
    %579 = vmatpush.msra.mxu0 %v559
    %580 = vmatmul.f32.gmra.mxu0 %v562
    %v581 = vpop.f32.mrf.mxu0
    %v582 = vadd.f32 0.0, %v581
    %583 = vdwg.mxu0
    %584 = vrot.lane.b32.xlu0 %v120, 64
    %v585 = vpop.permute.xlu0 %584
    %v588 = vsel %vm133, %v456, 0
    %590 = vmatpush.msra.mxu0 0.0
    %591 = vmatpush.msra.mxu0 0.0
    %592 = vmatpush.msra.mxu0 0.0
    %593 = vmatpush.msra.mxu0 0.0
    %594 = vmatpush.msra.mxu0 0.0
    %595 = vmatpush.msra.mxu0 0.0
    %596 = vmatpush.msra.mxu0 0.0
    %597 = vmatpush.msra.mxu0 0.0
    %598 = vmatpush.msra.mxu0 0.0
    %599 = vmatpush.msra.mxu0 0.0
    %600 = vmatpush.msra.mxu0 0.0
    %601 = vmatpush.msra.mxu0 0.0
    %602 = vmatpush.msra.mxu0 0.0
    %603 = vmatpush.msra.mxu0 0.0
    %604 = vmatpush.msra.mxu0 0.0
    %605 = vmatpush.msra.mxu0 %v585
    %606 = vmatmul.f32.gmra.mxu0 %v588
    %v607 = vpop.f32.mrf.mxu0
    %v608 = vadd.f32 0.0, %v607
    %609 = vdwg.mxu0
    %610 = vrot.lane.b32.xlu0 %v122, 64
    %v611 = vpop.permute.xlu0 %610
    %v614 = vsel %vm133, %v471, 0
    %616 = vmatpush.msra.mxu0 0.0
    %617 = vmatpush.msra.mxu0 0.0
    %618 = vmatpush.msra.mxu0 0.0
    %619 = vmatpush.msra.mxu0 0.0
    %620 = vmatpush.msra.mxu0 0.0
    %621 = vmatpush.msra.mxu0 0.0
    %622 = vmatpush.msra.mxu0 0.0
    %623 = vmatpush.msra.mxu0 0.0
    %624 = vmatpush.msra.mxu0 0.0
    %625 = vmatpush.msra.mxu0 0.0
    %626 = vmatpush.msra.mxu0 0.0
    %627 = vmatpush.msra.mxu0 0.0
    %628 = vmatpush.msra.mxu0 0.0
    %629 = vmatpush.msra.mxu0 0.0
    %630 = vmatpush.msra.mxu0 0.0
    %631 = vmatpush.msra.mxu0 %v611
    %632 = vmatmul.f32.gmra.mxu0 %v614
    %v633 = vpop.f32.mrf.mxu0
    %v634 = vadd.f32 0.0, %v633
    %635 = vdwg.mxu0
    %636 = vrot.lane.b32.xlu0 %v124, 64
    %v637 = vpop.permute.xlu0 %636
    %v640 = vsel %vm133, %v486, 0
    %642 = vmatpush.msra.mxu0 0.0
    %643 = vmatpush.msra.mxu0 0.0
    %644 = vmatpush.msra.mxu0 0.0
    %645 = vmatpush.msra.mxu0 0.0
    %646 = vmatpush.msra.mxu0 0.0
    %647 = vmatpush.msra.mxu0 0.0
    %648 = vmatpush.msra.mxu0 0.0
    %649 = vmatpush.msra.mxu0 0.0
    %650 = vmatpush.msra.mxu0 0.0
    %651 = vmatpush.msra.mxu0 0.0
    %652 = vmatpush.msra.mxu0 0.0
    %653 = vmatpush.msra.mxu0 0.0
    %654 = vmatpush.msra.mxu0 0.0
    %655 = vmatpush.msra.mxu0 0.0
    %656 = vmatpush.msra.mxu0 0.0
    %657 = vmatpush.msra.mxu0 %v637
    %658 = vmatmul.f32.gmra.mxu0 %v640
    %v659 = vpop.f32.mrf.mxu0
    %v660 = vadd.f32 0.0, %v659
    %661 = vdwg.mxu0
    %662 = vrot.lane.b32.xlu0 %v126, 64
    %v663 = vpop.permute.xlu0 %662
    %v666 = vsel %vm133, %v501, 0
    %668 = vmatpush.msra.mxu0 0.0
    %669 = vmatpush.msra.mxu0 0.0
    %670 = vmatpush.msra.mxu0 0.0
    %671 = vmatpush.msra.mxu0 0.0
    %672 = vmatpush.msra.mxu0 0.0
    %673 = vmatpush.msra.mxu0 0.0
    %674 = vmatpush.msra.mxu0 0.0
    %675 = vmatpush.msra.mxu0 0.0
    %676 = vmatpush.msra.mxu0 0.0
    %677 = vmatpush.msra.mxu0 0.0
    %678 = vmatpush.msra.mxu0 0.0
    %679 = vmatpush.msra.mxu0 0.0
    %680 = vmatpush.msra.mxu0 0.0
    %681 = vmatpush.msra.mxu0 0.0
    %682 = vmatpush.msra.mxu0 0.0
    %683 = vmatpush.msra.mxu0 %v663
    %684 = vmatmul.f32.gmra.mxu0 %v666
    %v685 = vpop.f32.mrf.mxu0
    %v686 = vadd.f32 0.0, %v685
    %687 = vdwg.mxu0
    %688 = vrot.lane.b32.xlu0 %v128, 64
    %v689 = vpop.permute.xlu0 %688
    %v692 = vsel %vm133, %v516, 0
    %694 = vmatpush.msra.mxu0 0.0
    %695 = vmatpush.msra.mxu0 0.0
    %696 = vmatpush.msra.mxu0 0.0
    %697 = vmatpush.msra.mxu0 0.0
    %698 = vmatpush.msra.mxu0 0.0
    %699 = vmatpush.msra.mxu0 0.0
    %700 = vmatpush.msra.mxu0 0.0
    %701 = vmatpush.msra.mxu0 0.0
    %702 = vmatpush.msra.mxu0 0.0
    %703 = vmatpush.msra.mxu0 0.0
    %704 = vmatpush.msra.mxu0 0.0
    %705 = vmatpush.msra.mxu0 0.0
    %706 = vmatpush.msra.mxu0 0.0
    %707 = vmatpush.msra.mxu0 0.0
    %708 = vmatpush.msra.mxu0 0.0
    %709 = vmatpush.msra.mxu0 %v689
    %710 = vmatmul.f32.gmra.mxu0 %v692
    %v711 = vpop.f32.mrf.mxu0
    %v712 = vadd.f32 0.0, %v711
    %713 = vdwg.mxu0
    %714 = vrot.lane.b32.xlu0 %v130, 64
    %v715 = vpop.permute.xlu0 %714
    %v718 = vsel %vm133, %v531, 0
    %720 = vmatpush.msra.mxu0 0.0
    %721 = vmatpush.msra.mxu0 0.0
    %722 = vmatpush.msra.mxu0 0.0
    %723 = vmatpush.msra.mxu0 0.0
    %724 = vmatpush.msra.mxu0 0.0
    %725 = vmatpush.msra.mxu0 0.0
    %726 = vmatpush.msra.mxu0 0.0
    %727 = vmatpush.msra.mxu0 0.0
    %728 = vmatpush.msra.mxu0 0.0
    %729 = vmatpush.msra.mxu0 0.0
    %730 = vmatpush.msra.mxu0 0.0
    %731 = vmatpush.msra.mxu0 0.0
    %732 = vmatpush.msra.mxu0 0.0
    %733 = vmatpush.msra.mxu0 0.0
    %734 = vmatpush.msra.mxu0 0.0
    %735 = vmatpush.msra.mxu0 %v715
    %736 = vmatmul.f32.gmra.mxu0 %v718
    %v737 = vpop.f32.mrf.mxu0
    %v738 = vadd.f32 0.0, %v737
    %739 = vdwg.mxu0
    %v740 = vld [vmem:[%s3] sm:$0xff]
    %v741 = vld [vmem:[%s3 + $0x8] sm:$0xff]
    %v742 = vld [vmem:[%s3 + $0x10] sm:$0xff]
    %v743 = vld [vmem:[%s3 + $0x18] sm:$0xff]
    %v745 = vsel %vm133, %v556, 0
    %v748 = vsel %vm133, %v582, 0
    %750 = vmatpush.msra.mxu0 0.0
    %751 = vmatpush.msra.mxu0 0.0
    %752 = vmatpush.msra.mxu0 0.0
    %753 = vmatpush.msra.mxu0 0.0
    %754 = vmatpush.msra.mxu0 0.0
    %755 = vmatpush.msra.mxu0 0.0
    %756 = vmatpush.msra.mxu0 0.0
    %757 = vmatpush.msra.mxu0 0.0
    %758 = vmatpush.msra.mxu0 0.0
    %759 = vmatpush.msra.mxu0 0.0
    %760 = vmatpush.msra.mxu0 0.0
    %761 = vmatpush.msra.mxu0 0.0
    %762 = vmatpush.msra.mxu0 0.0
    %763 = vmatpush.msra.mxu0 0.0
    %764 = vmatpush.msra.mxu0 0.0
    %765 = vmatpush.msra.mxu0 %v740
    %766 = vmatmul.f32.gmra.mxu0 %v745
    %v767 = vpop.f32.mrf.mxu0
    %v768 = vadd.f32 0.0, %v767
    %769 = vmatmul.f32.gmra.mxu0 %v748
    %v770 = vpop.f32.mrf.mxu0
    %v771 = vadd.f32 0.0, %v770
    %772 = vdwg.mxu0
    %v774 = vsel %vm133, %v608, 0
    %v777 = vsel %vm133, %v634, 0
    %779 = vmatpush.msra.mxu0 0.0
    %780 = vmatpush.msra.mxu0 0.0
    %781 = vmatpush.msra.mxu0 0.0
    %782 = vmatpush.msra.mxu0 0.0
    %783 = vmatpush.msra.mxu0 0.0
    %784 = vmatpush.msra.mxu0 0.0
    %785 = vmatpush.msra.mxu0 0.0
    %786 = vmatpush.msra.mxu0 0.0
    %787 = vmatpush.msra.mxu0 0.0
    %788 = vmatpush.msra.mxu0 0.0
    %789 = vmatpush.msra.mxu0 0.0
    %790 = vmatpush.msra.mxu0 0.0
    %791 = vmatpush.msra.mxu0 0.0
    %792 = vmatpush.msra.mxu0 0.0
    %793 = vmatpush.msra.mxu0 0.0
    %794 = vmatpush.msra.mxu0 %v741
    %795 = vmatmul.f32.gmra.mxu0 %v774
    %v796 = vpop.f32.mrf.mxu0
    %v797 = vadd.f32 0.0, %v796
    %798 = vmatmul.f32.gmra.mxu0 %v777
    %v799 = vpop.f32.mrf.mxu0
    %v800 = vadd.f32 0.0, %v799
    %801 = vdwg.mxu0
    %v803 = vsel %vm133, %v660, 0
    %v806 = vsel %vm133, %v686, 0
    %808 = vmatpush.msra.mxu0 0.0
    %809 = vmatpush.msra.mxu0 0.0
    %810 = vmatpush.msra.mxu0 0.0
    %811 = vmatpush.msra.mxu0 0.0
    %812 = vmatpush.msra.mxu0 0.0
    %813 = vmatpush.msra.mxu0 0.0
    %814 = vmatpush.msra.mxu0 0.0
    %815 = vmatpush.msra.mxu0 0.0
    %816 = vmatpush.msra.mxu0 0.0
    %817 = vmatpush.msra.mxu0 0.0
    %818 = vmatpush.msra.mxu0 0.0
    %819 = vmatpush.msra.mxu0 0.0
    %820 = vmatpush.msra.mxu0 0.0
    %821 = vmatpush.msra.mxu0 0.0
    %822 = vmatpush.msra.mxu0 0.0
    %823 = vmatpush.msra.mxu0 %v742
    %824 = vmatmul.f32.gmra.mxu0 %v803
    %v825 = vpop.f32.mrf.mxu0
    %v826 = vadd.f32 0.0, %v825
    %827 = vmatmul.f32.gmra.mxu0 %v806
    %v828 = vpop.f32.mrf.mxu0
    %v829 = vadd.f32 0.0, %v828
    %830 = vdwg.mxu0
    %v832 = vsel %vm133, %v712, 0
    %v835 = vsel %vm133, %v738, 0
    %837 = vmatpush.msra.mxu0 0.0
    %838 = vmatpush.msra.mxu0 0.0
    %839 = vmatpush.msra.mxu0 0.0
    %840 = vmatpush.msra.mxu0 0.0
    %841 = vmatpush.msra.mxu0 0.0
    %842 = vmatpush.msra.mxu0 0.0
    %843 = vmatpush.msra.mxu0 0.0
    %844 = vmatpush.msra.mxu0 0.0
    %845 = vmatpush.msra.mxu0 0.0
    %846 = vmatpush.msra.mxu0 0.0
    %847 = vmatpush.msra.mxu0 0.0
    %848 = vmatpush.msra.mxu0 0.0
    %849 = vmatpush.msra.mxu0 0.0
    %850 = vmatpush.msra.mxu0 0.0
    %851 = vmatpush.msra.mxu0 0.0
    %852 = vmatpush.msra.mxu0 %v743
    %853 = vmatmul.f32.gmra.mxu0 %v832
    %v854 = vpop.f32.mrf.mxu0
    %v855 = vadd.f32 0.0, %v854
    %856 = vmatmul.f32.gmra.mxu0 %v835
    %v857 = vpop.f32.mrf.mxu0
    %v858 = vadd.f32 0.0, %v857
    %859 = vdwg.mxu0
    %v860 = vld [vmem:[%s4] sm:$0x1]
    %v862 = vperm.slane %v860, 0
    %v864 = vadd.f32 %v862, %v768
    %v865 = vadd.f32 %v862, %v771
    %v866 = vadd.f32 %v864, %v797
    %v867 = vadd.f32 %v865, %v800
    %v868 = vadd.f32 %v866, %v826
    %v869 = vadd.f32 %v867, %v829
    %v870 = vadd.f32 %v868, %v855
    %v871 = vadd.f32 %v869, %v858
    %v872 = vadd.f32 %v61, %v870
    %v873 = vadd.f32 %v62, %v871
    %v874 = vld [vmem:[%s5] sm:$0x1]
    %v875 = vld [vmem:[%s6] sm:$0x1]
    %v876 = vsel %vm71, %v872, 0.0
    %877 = vadd.xlane.f32.xlu0 %v876
    %v878 = vpop.xlane.xlu0 %877
    %v879 = vsel %vm71, %v873, 0.0
    %880 = vadd.xlane.f32.xlu0 %v879
    %v881 = vpop.xlane.xlu0 %880
    %v882 = vrcp.pop 32.0
    %v883 = vmul.f32 32.0, %v882
    %v884 = vsub.f32 1.0, %v883
    %v885 = vmul.f32 %v882, %v884
    %v886 = vadd.f32 %v882, %v885
    %vm887 = vweird.f32 %v882
    %v888 = vsel %vm887, %v882, %v886
    %v889 = vmul.f32 %v878, %v888
    %v890 = vmul.f32 %v881, %v888
    %v891 = vsub.f32 %v872, %v889
    %v892 = vsub.f32 %v873, %v890
    %v893 = vmul.f32 %v891, %v891
    %v894 = vmul.f32 %v892, %v892
    %v895 = vsel %vm71, %v893, 0.0
    %896 = vadd.xlane.f32.xlu0 %v895
    %v897 = vpop.xlane.xlu0 %896
    %v898 = vsel %vm71, %v894, 0.0
    %899 = vadd.xlane.f32.xlu0 %v898
    %v900 = vpop.xlane.xlu0 %899
    %v901 = vmul.f32 %v897, %v888
    %v902 = vmul.f32 %v900, %v888
    %v903 = vadd.f32 %v901, 1e-05
    %v904 = vadd.f32 %v902, 1e-05
    %v905 = vrsqrt.pop %v903
    %v906 = vmul.f32 %v905, %v903
    %v907 = vmul.f32 %v906, %v905
    %v908 = vmul.f32 0.5, %v907
    %v909 = vsub.f32 1.5, %v908
    %v910 = vmul.f32 %v905, %v909
    %vm911 = vweird.f32 %v903
    %vm912 = vweird.f32 %v905
    %vm913 = vmor %vm911, %vm912
    %v914 = vsel %vm913, %v905, %v910
    %v915 = vrsqrt.pop %v904
    %v916 = vmul.f32 %v915, %v904
    %v917 = vmul.f32 %v916, %v915
    %v918 = vmul.f32 0.5, %v917
    %v919 = vsub.f32 1.5, %v918
    %v920 = vmul.f32 %v915, %v919
    %vm921 = vweird.f32 %v904
    %vm922 = vweird.f32 %v915
    %vm923 = vmor %vm921, %vm922
    %v924 = vsel %vm923, %v915, %v920
    %v925 = vmul.f32 %v891, %v914
    %v926 = vmul.f32 %v892, %v924
    %v928 = vperm.slane %v874, 0
    %v930 = vmul.f32 %v925, %v928
    %v931 = vmul.f32 %v926, %v928
    %v933 = vperm.slane %v875, 0
    %v935 = vadd.f32 %v930, %v933
    %v936 = vadd.f32 %v931, %v933
    %v937 = vld [vmem:[%s7] sm:$0xff]
    %v938 = vld [vmem:[%s7 + $0x8] sm:$0xff]
    %v939 = vld [vmem:[%s7 + $0x10] sm:$0xff]
    %v940 = vld [vmem:[%s7 + $0x18] sm:$0xff]
    %v941 = vld [vmem:[%s8] sm:$0x1]
    %v943 = vperm.slane %v941, 0
    %v946 = vsel %vm71, %v935, 0
    %v949 = vsel %vm71, %v936, 0
    %951 = vmatpush.msra.mxu0 0.0
    %952 = vmatpush.msra.mxu0 0.0
    %953 = vmatpush.msra.mxu0 0.0
    %954 = vmatpush.msra.mxu0 0.0
    %955 = vmatpush.msra.mxu0 0.0
    %956 = vmatpush.msra.mxu0 0.0
    %957 = vmatpush.msra.mxu0 0.0
    %958 = vmatpush.msra.mxu0 0.0
    %959 = vmatpush.msra.mxu0 0.0
    %960 = vmatpush.msra.mxu0 0.0
    %961 = vmatpush.msra.mxu0 0.0
    %962 = vmatpush.msra.mxu0 0.0
    %963 = vmatpush.msra.mxu0 %v940
    %964 = vmatpush.msra.mxu0 %v939
    %965 = vmatpush.msra.mxu0 %v938
    %966 = vmatpush.msra.mxu0 %v937
    %967 = vmatmul.f32.gmra.mxu0 %v946
    %v968 = vpop.f32.mrf.mxu0
    %v969 = vadd.f32 %v943, %v968
    %970 = vmatmul.f32.gmra.mxu0 %v949
    %v971 = vpop.f32.mrf.mxu0
    %v972 = vadd.f32 %v943, %v971
    %973 = vdwg.mxu0
    %v974 = vmax.f32 %v969, 0.0
    %v975 = vmax.f32 %v972, 0.0
    %v976 = vld [vmem:[%s9] sm:$0xff]
    %v977 = vld [vmem:[%s9 + $0x8] sm:$0xff]
    %v978 = vld [vmem:[%s9 + $0x10] sm:$0xff]
    %v979 = vld [vmem:[%s9 + $0x18] sm:$0xff]
    %v980 = vld [vmem:[%s9 + $0x20] sm:$0xff]
    %v981 = vld [vmem:[%s9 + $0x28] sm:$0xff]
    %v982 = vld [vmem:[%s9 + $0x30] sm:$0xff]
    %v983 = vld [vmem:[%s9 + $0x38] sm:$0xff]
    %v984 = vld [vmem:[%s10] sm:$0x1]
    %v986 = vperm.slane %v984, 0
    %vm988 = vcmask 523264
    %v990 = vsel %vm988, %v974, 0
    %v993 = vsel %vm988, %v975, 0
    %995 = vmatpush.msra.mxu0 0.0
    %996 = vmatpush.msra.mxu0 0.0
    %997 = vmatpush.msra.mxu0 0.0
    %998 = vmatpush.msra.mxu0 0.0
    %999 = vmatpush.msra.mxu0 0.0
    %1000 = vmatpush.msra.mxu0 0.0
    %1001 = vmatpush.msra.mxu0 0.0
    %1002 = vmatpush.msra.mxu0 0.0
    %1003 = vmatpush.msra.mxu0 %v983
    %1004 = vmatpush.msra.mxu0 %v982
    %1005 = vmatpush.msra.mxu0 %v981
    %1006 = vmatpush.msra.mxu0 %v980
    %1007 = vmatpush.msra.mxu0 %v979
    %1008 = vmatpush.msra.mxu0 %v978
    %1009 = vmatpush.msra.mxu0 %v977
    %1010 = vmatpush.msra.mxu0 %v976
    %1011 = vmatmul.f32.gmra.mxu0 %v990
    %v1012 = vpop.f32.mrf.mxu0
    %v1013 = vadd.f32 %v986, %v1012
    %1014 = vmatmul.f32.gmra.mxu0 %v993
    %v1015 = vpop.f32.mrf.mxu0
    %v1016 = vadd.f32 %v986, %v1015
    %1017 = vdwg.mxu0
    %v1018 = vadd.f32 %v935, %v1013
    %v1019 = vadd.f32 %v936, %v1016
    %v1020 = vld [vmem:[%s11] sm:$0x1]
    %v1021 = vld [vmem:[%s12] sm:$0x1]
    %v1022 = vsel %vm71, %v1018, 0.0
    %1023 = vadd.xlane.f32.xlu0 %v1022
    %v1024 = vpop.xlane.xlu0 %1023
    %v1025 = vsel %vm71, %v1019, 0.0
    %1026 = vadd.xlane.f32.xlu0 %v1025
    %v1027 = vpop.xlane.xlu0 %1026
    %v1028 = vmul.f32 %v1024, %v888
    %v1029 = vmul.f32 %v1027, %v888
    %v1030 = vsub.f32 %v1018, %v1028
    %v1031 = vsub.f32 %v1019, %v1029
    %v1032 = vmul.f32 %v1030, %v1030
    %v1033 = vmul.f32 %v1031, %v1031
    %v1034 = vsel %vm71, %v1032, 0.0
    %1035 = vadd.xlane.f32.xlu0 %v1034
    %v1036 = vpop.xlane.xlu0 %1035
    %v1037 = vsel %vm71, %v1033, 0.0
    %1038 = vadd.xlane.f32.xlu0 %v1037
    %v1039 = vpop.xlane.xlu0 %1038
    %v1040 = vmul.f32 %v1036, %v888
    %v1041 = vmul.f32 %v1039, %v888
    %v1042 = vadd.f32 %v1040, 1e-05
    %v1043 = vadd.f32 %v1041, 1e-05
    %v1044 = vrsqrt.pop %v1042
    %v1045 = vmul.f32 %v1044, %v1042
    %v1046 = vmul.f32 %v1045, %v1044
    %v1047 = vmul.f32 0.5, %v1046
    %v1048 = vsub.f32 1.5, %v1047
    %v1049 = vmul.f32 %v1044, %v1048
    %vm1050 = vweird.f32 %v1042
    %vm1051 = vweird.f32 %v1044
    %vm1052 = vmor %vm1050, %vm1051
    %v1053 = vsel %vm1052, %v1044, %v1049
    %v1054 = vrsqrt.pop %v1043
    %v1055 = vmul.f32 %v1054, %v1043
    %v1056 = vmul.f32 %v1055, %v1054
    %v1057 = vmul.f32 0.5, %v1056
    %v1058 = vsub.f32 1.5, %v1057
    %v1059 = vmul.f32 %v1054, %v1058
    %vm1060 = vweird.f32 %v1043
    %vm1061 = vweird.f32 %v1054
    %vm1062 = vmor %vm1060, %vm1061
    %v1063 = vsel %vm1062, %v1054, %v1059
    %v1064 = vmul.f32 %v1030, %v1053
    %v1065 = vmul.f32 %v1031, %v1063
    %v1067 = vperm.slane %v1020, 0
    %v1069 = vmul.f32 %v1064, %v1067
    %v1070 = vmul.f32 %v1065, %v1067
    %v1072 = vperm.slane %v1021, 0
    %v1074 = vadd.f32 %v1069, %v1072
    %v1075 = vadd.f32 %v1070, %v1072
    %1076 = vst.msk [vmem:[#allocation5] sm:$0xff] %vm71, %v1074
    %1077 = vst.msk [vmem:[#allocation5 + $0x8] sm:$0xff] %vm71, %v1075
    // Predicated region
    $region58: #{tpu_custom_call.1} parent=1 // pred_check
      _
    $region59: #{tpu_custom_call.1} parent=1 // pred_check_branch
      %1079 = sbr.rel (0) target = $region61
    $region60: #{tpu_custom_call.1} parent=1 // pred_region
      %1081 = vsyncadd [#allocation4], 0
      %s1082 = sshll.u32 [#allocation5], 4
      %s1083 = int_to_ptr.vmem [resolvable:$true] %s1082
      %s1084 = sshll.u32 %s13, 4
      %s1085 = int_to_ptr.hbm [resolvable:$true] %s1084
      %1090 = dma.vmem_to_hbm [thread:$0]  %s1083, 256, %s1085, [#allocation4], 128, 128, 8
    $region61: #{tpu_custom_call.1} parent=1 // pred_fallthru
      _
    // Predicated region
    $region62: #{tpu_custom_call.1} parent=1 // pred_check
      _
    $region63: #{tpu_custom_call.1} parent=1 // pred_check_branch
      %1092 = sbr.rel (0) target = $region65
    $region64: #{tpu_custom_call.1} parent=1 // pred_region
      %1094 = dma.done [#allocation4], 256
    $region65: #{tpu_custom_call.1} parent=1 // pred_fallthru
      _
    %1095 = vsyncpa [#allocation3], 1
    %1096 = vsyncpa [#allocation4], 1

</llo_original>
